<compile_context>
chip_gen: v7x
topology: tpu7x:2x2x1
jax: 0.10.0
libtpu: 0.0.40
codegen_flags: <defaults>
</compile_context>

<pallas_src>
import functools

import jax
import jax.numpy as jnp
import numpy as np
from jax.experimental import pallas as pl
from jax.experimental.pallas import tpu as pltpu

KD = KH = KW = 3
EPS = 1e-5
NEG_SLOPE = 0.01


def _round_up(x, m):
    return (x + m - 1) // m * m


def _build_patches_t(x0, x1, x2, *, w2, m_plane):
    """Transposed im2col tile (27*Cin_pad, m_plane) from three depth-slice slabs.

    Each slab is (Cin_pad, (H+3)*(W+2)) — a zero-padded, spatially flattened
    plane.  For output flat position q and tap (kh, kw) the input sits at flat
    position q + kh*(W+2) + kw, so every tap is a *static* lane slice.
    """
    rows = []
    for slab in (x0, x1, x2):                      # kd = 0, 1, 2 (depth taps)
        for kh in range(KH):
            for kw in range(KW):
                off = kh * w2 + kw                 # static lane offset
                rows.append(slab[:, off:off + m_plane])
    return jnp.concatenate(rows, axis=0)           # (27*Cin_pad, m_plane)


# -----------------------------------------------------------------------------
# Pass 1: conv tile (single folded-K MXU matmul) + masked per-channel partial
#         sum / sum-of-squares for BatchNorm statistics.  Fully parallel grid.
# -----------------------------------------------------------------------------
def conv_stats_kernel(x0_ref, x1_ref, x2_ref, w_ref, sum_ref, ssq_ref,
                      *, w2, w_valid, m_plane):
    pt = _build_patches_t(x0_ref[...], x1_ref[...], x2_ref[...],
                          w2=w2, m_plane=m_plane)
    y = jnp.dot(w_ref[...], pt.astype(jnp.bfloat16),
                preferred_element_type=jnp.float32)       # (cout_pad, m_plane)
    # Mask out the two junk columns per flat row (w in [W, W+2)).
    col = jax.lax.broadcasted_iota(jnp.int32, (1, m_plane), 1) % w2
    valid = (col < w_valid).astype(jnp.float32)
    yv = y * valid
    sum_ref[...] = jnp.sum(yv, axis=1, keepdims=True)     # (cout_pad, 1)
    ssq_ref[...] = jnp.sum(yv * y, axis=1, keepdims=True)


# -----------------------------------------------------------------------------
# Pass 2: recompute conv tile, apply fused BN scale/shift + LeakyReLU, store
#         a lane-dense (cout_pad, m_plane) tile.  Fully parallel grid.
# -----------------------------------------------------------------------------
def conv_bn_lrelu_kernel(x0_ref, x1_ref, x2_ref, w_ref, scale_ref, shift_ref,
                         out_ref, *, w2, m_plane):
    pt = _build_patches_t(x0_ref[...], x1_ref[...], x2_ref[...],
                          w2=w2, m_plane=m_plane)
    y = jnp.dot(w_ref[...], pt.astype(jnp.bfloat16),
                preferred_element_type=jnp.float32)       # (cout_pad, m_plane)
    z = y * scale_ref[...] + shift_ref[...]               # broadcast (cout_pad,1)
    out_ref[...] = jnp.where(z >= 0, z, NEG_SLOPE * z).astype(out_ref.dtype)


def basic_conv3d(x, weight, gamma, beta):
    """BasicConv3d forward: Conv3d(k=3,s=1,p=1,bias=False) + BN3d + LeakyReLU.

    x:      (N, Cin, D, H, W) f32 (PyTorch NCDHW layout)
    weight: (Cout, Cin, 3, 3, 3) f32
    gamma, beta: (Cout,) f32
    returns (N, Cout, D, H, W) f32
    """
    n, cin, d, h, w = x.shape
    cout = weight.shape[0]
    cin_pad = _round_up(cin, 8)       # aligned sublane pieces for the patch build
    cout_pad = _round_up(cout, 8)     # channel axis only needs sublane alignment
    k = KD * KH * KW * cin_pad
    w2 = w + 2
    plane = (h + 3) * w2              # padded plane, flattened (extra H row keeps
                                      # all tap reads in bounds)
    m_plane = h * w2                  # flat output positions per (n, d) tile

    # ---- input prep: one transpose + pad, no duplication ----
    xt = jnp.transpose(x, (0, 2, 1, 3, 4))                         # (N, D, Cin, H, W)
    xp = jnp.pad(xt, ((0, 0), (1, 1), (0, cin_pad - cin), (1, 2), (1, 1)))
    xflat = xp.reshape(n, d + 2, cin_pad, plane)                   # f32

    # ---- weights: (Cout, Cin, 3,3,3) -> (Cout_pad, 27*Cin_pad), tap-major ----
    wt = jnp.transpose(weight, (0, 2, 3, 4, 1))                    # (Cout, kd,kh,kw, Cin)
    wt = jnp.pad(wt, ((0, cout_pad - cout), (0, 0), (0, 0), (0, 0),
                      (0, cin_pad - cin)))
    wmat = wt.reshape(cout_pad, k).astype(jnp.bfloat16)

    grid = (n, d)

    def x_spec(kd):
        return pl.BlockSpec((None, None, cin_pad, plane),
                            lambda ni, di, kd=kd: (ni, di + kd, 0, 0))

    # Per-step VMEM working set is tiny (per-plane tiles); set an explicit,
    # safe scoped-VMEM limit anyway (v5e default is only 16 MiB).
    step_bytes = (2 * 3 * cin_pad * plane * 4      # double-buffered input slabs
                  + cout_pad * k * 2               # resident weights
                  + 2 * cout_pad * m_plane * 4     # double-buffered output tile
                  + 2 * k * m_plane * 4)           # patch build / matmul temps
    vmem_limit = int(min(max(4 * step_bytes, 32 * 1024 * 1024), 48 * 1024 * 1024))
    cparams = pltpu.CompilerParams(
        dimension_semantics=("parallel", "parallel"),
        vmem_limit_bytes=vmem_limit)

    # ---- pass 1: conv + masked per-tile BN partial sums ----
    sums, ssqs = pl.pallas_call(
        functools.partial(conv_stats_kernel, w2=w2, w_valid=w, m_plane=m_plane),
        out_shape=(jax.ShapeDtypeStruct((n, d, cout_pad, 1), jnp.float32),
                   jax.ShapeDtypeStruct((n, d, cout_pad, 1), jnp.float32)),
        grid=grid,
        in_specs=[x_spec(0), x_spec(1), x_spec(2),
                  pl.BlockSpec((cout_pad, k), lambda ni, di: (0, 0))],
        out_specs=(
            pl.BlockSpec((None, None, cout_pad, 1), lambda ni, di: (ni, di, 0, 0)),
            pl.BlockSpec((None, None, cout_pad, 1), lambda ni, di: (ni, di, 0, 0)),
        ),
        compiler_params=cparams,
    )(xflat, xflat, xflat, wmat)

    # ---- tiny XLA epilogue: Chan-style parallel variance combine ----
    n_t = jnp.float32(h * w)                       # valid positions per tile
    m_total = jnp.float32(n * d * h * w)
    s = sums.reshape(n * d, cout_pad)
    ss = ssqs.reshape(n * d, cout_pad)
    mean_t = s / n_t
    m2_t = ss - n_t * mean_t * mean_t
    mean = jnp.sum(s, axis=0) / m_total
    var = (jnp.sum(m2_t, axis=0)
           + n_t * jnp.sum((mean_t - mean) ** 2, axis=0)) / m_total   # biased var
    gamma_p = jnp.pad(gamma.astype(jnp.float32), (0, cout_pad - cout),
                      constant_values=1.0)
    beta_p = jnp.pad(beta.astype(jnp.float32), (0, cout_pad - cout))
    scale_v = gamma_p * jax.lax.rsqrt(var + EPS)
    shift_v = beta_p - mean * scale_v
    scale = scale_v.reshape(cout_pad, 1)
    shift = shift_v.reshape(cout_pad, 1)

    # ---- pass 2: recompute conv + fused BN apply + LeakyReLU ----
    out_tiles = pl.pallas_call(
        functools.partial(conv_bn_lrelu_kernel, w2=w2, m_plane=m_plane),
        out_shape=jax.ShapeDtypeStruct((n, d, cout_pad, m_plane), jnp.float32),
        grid=grid,
        in_specs=[x_spec(0), x_spec(1), x_spec(2),
                  pl.BlockSpec((cout_pad, k), lambda ni, di: (0, 0)),
                  pl.BlockSpec((cout_pad, 1), lambda ni, di: (0, 0)),
                  pl.BlockSpec((cout_pad, 1), lambda ni, di: (0, 0))],
        out_specs=pl.BlockSpec((None, None, cout_pad, m_plane),
                               lambda ni, di: (ni, di, 0, 0)),
        compiler_params=cparams,
    )(xflat, xflat, xflat, wmat, scale, shift)

    # ---- drop padding / junk columns; NCDHW fix-up moves contiguous HW blocks ----
    out = out_tiles[:, :, :cout, :].reshape(n, d, cout, h, w2)[..., :w]
    return jnp.transpose(out, (0, 2, 1, 3, 4))


def reference(x, weight, gamma, beta):
    """Pure-JAX reference matching PyTorch semantics (f32, training-mode BN)."""
    y = jax.lax.conv_general_dilated(
        x, weight,
        window_strides=(1, 1, 1),
        padding=((1, 1), (1, 1), (1, 1)),
        dimension_numbers=("NCDHW", "OIDHW", "NCDHW"),
        precision=jax.lax.Precision.HIGHEST,
    )
    mean = jnp.mean(y, axis=(0, 2, 3, 4), keepdims=True)
    var = jnp.mean((y - mean) ** 2, axis=(0, 2, 3, 4), keepdims=True)
    yh = (y - mean) * jax.lax.rsqrt(var + EPS)
    yh = yh * gamma.reshape(1, -1, 1, 1, 1) + beta.reshape(1, -1, 1, 1, 1)
    return jnp.where(yh >= 0, yh, NEG_SLOPE * yh)


if __name__ == "__main__":
    # Small shapes consistent with a BasicConv3d forward (k=3, s=1, p=1).
    N, CIN, COUT, D, H, W = 2, 4, 8, 8, 16, 16

    key = jax.random.PRNGKey(0)
    kx, kw = jax.random.split(key)
    x = jax.random.normal(kx, (N, CIN, D, H, W), dtype=jnp.float32)
    weight = jax.random.normal(kw, (COUT, CIN, KD, KH, KW), dtype=jnp.float32) * 0.1
    gamma = jnp.ones((COUT,), dtype=jnp.float32)    # BatchNorm3d init
    beta = jnp.zeros((COUT,), dtype=jnp.float32)    # BatchNorm3d init

    out = jax.block_until_ready(jax.jit(basic_conv3d)(x, weight, gamma, beta))

    # Tight check vs a reference fed the same bf16-quantized inputs the MXU sees
    # (the kernel accumulates in f32, so only input rounding differs).
    x_q = x.astype(jnp.bfloat16).astype(jnp.float32)
    w_q = weight.astype(jnp.bfloat16).astype(jnp.float32)
    ref_q = jax.block_until_ready(reference(x_q, w_q, gamma, beta))
    np.testing.assert_allclose(np.asarray(out), np.asarray(ref_q),
                               rtol=2e-3, atol=2e-3)

    # Loose check vs the exact f32 PyTorch-semantics reference.
    ref = jax.block_until_ready(reference(x, weight, gamma, beta))
    np.testing.assert_allclose(np.asarray(out), np.asarray(ref),
                               rtol=6e-2, atol=6e-2)

    print("KERNEL_OK")
</pallas_src>

<mosaic_0001>
module attributes {stable_mosaic.version = 11 : i64} {
  func.func @conv_stats_kernel(%arg0: i32, %arg1: i32, %arg2: memref<1x1x8x342xf32, #tpu.memory_space<vmem>>, %arg3: memref<1x1x8x342xf32, #tpu.memory_space<vmem>>, %arg4: memref<1x1x8x342xf32, #tpu.memory_space<vmem>>, %arg5: memref<8x216xbf16, #tpu.memory_space<vmem>>, %arg6: memref<1x1x8x1xf32, #tpu.memory_space<vmem>>, %arg7: memref<1x1x8x1xf32, #tpu.memory_space<vmem>>) attributes {dimension_semantics = [#tpu.dimension_semantics<parallel>, #tpu.dimension_semantics<parallel>], iteration_bounds = array<i64: 2, 8>, scalar_prefetch = 0 : i64, scratch_operands = 0 : i64, tpu.core_type = #tpu.core_type<tc>, window_params = [{transform_indices = @transform_0, window_bounds = array<i64: 1, 1, 8, 342>}, {transform_indices = @transform_1, window_bounds = array<i64: 1, 1, 8, 342>}, {transform_indices = @transform_2, window_bounds = array<i64: 1, 1, 8, 342>}, {pipeline_mode = #tpu.pipeline_mode<synchronous>, transform_indices = @transform_3, window_bounds = array<i64: 8, 216>}, {transform_indices = @transform_4, window_bounds = array<i64: 1, 1, 8, 1>}, {transform_indices = @transform_5, window_bounds = array<i64: 1, 1, 8, 1>}]} {
    %c0 = arith.constant 0 : index
    %c0_0 = arith.constant 0 : index
    %c0_1 = arith.constant 0 : index
    %c0_2 = arith.constant 0 : index
    %0 = vector.load %arg2[%c0, %c0_0, %c0_1, %c0_2] : memref<1x1x8x342xf32, #tpu.memory_space<vmem>>, vector<1x1x8x342xf32>
    %1 = vector.shape_cast %0 : vector<1x1x8x342xf32> to vector<8x342xf32>
    %c0_3 = arith.constant 0 : index
    %c0_4 = arith.constant 0 : index
    %c0_5 = arith.constant 0 : index
    %c0_6 = arith.constant 0 : index
    %2 = vector.load %arg3[%c0_3, %c0_4, %c0_5, %c0_6] : memref<1x1x8x342xf32, #tpu.memory_space<vmem>>, vector<1x1x8x342xf32>
    %3 = vector.shape_cast %2 : vector<1x1x8x342xf32> to vector<8x342xf32>
    %c0_7 = arith.constant 0 : index
    %c0_8 = arith.constant 0 : index
    %c0_9 = arith.constant 0 : index
    %c0_10 = arith.constant 0 : index
    %4 = vector.load %arg4[%c0_7, %c0_8, %c0_9, %c0_10] : memref<1x1x8x342xf32, #tpu.memory_space<vmem>>, vector<1x1x8x342xf32>
    %5 = vector.shape_cast %4 : vector<1x1x8x342xf32> to vector<8x342xf32>
    %6 = vector.extract_strided_slice %1 {offsets = [0, 0], sizes = [8, 288], strides = [1, 1]} : vector<8x342xf32> to vector<8x288xf32>
    %7 = vector.extract_strided_slice %1 {offsets = [0, 1], sizes = [8, 288], strides = [1, 1]} : vector<8x342xf32> to vector<8x288xf32>
    %8 = vector.extract_strided_slice %1 {offsets = [0, 2], sizes = [8, 288], strides = [1, 1]} : vector<8x342xf32> to vector<8x288xf32>
    %9 = vector.extract_strided_slice %1 {offsets = [0, 18], sizes = [8, 288], strides = [1, 1]} : vector<8x342xf32> to vector<8x288xf32>
    %10 = vector.extract_strided_slice %1 {offsets = [0, 19], sizes = [8, 288], strides = [1, 1]} : vector<8x342xf32> to vector<8x288xf32>
    %11 = vector.extract_strided_slice %1 {offsets = [0, 20], sizes = [8, 288], strides = [1, 1]} : vector<8x342xf32> to vector<8x288xf32>
    %12 = vector.extract_strided_slice %1 {offsets = [0, 36], sizes = [8, 288], strides = [1, 1]} : vector<8x342xf32> to vector<8x288xf32>
    %13 = vector.extract_strided_slice %1 {offsets = [0, 37], sizes = [8, 288], strides = [1, 1]} : vector<8x342xf32> to vector<8x288xf32>
    %14 = vector.extract_strided_slice %1 {offsets = [0, 38], sizes = [8, 288], strides = [1, 1]} : vector<8x342xf32> to vector<8x288xf32>
    %15 = vector.extract_strided_slice %3 {offsets = [0, 0], sizes = [8, 288], strides = [1, 1]} : vector<8x342xf32> to vector<8x288xf32>
    %16 = vector.extract_strided_slice %3 {offsets = [0, 1], sizes = [8, 288], strides = [1, 1]} : vector<8x342xf32> to vector<8x288xf32>
    %17 = vector.extract_strided_slice %3 {offsets = [0, 2], sizes = [8, 288], strides = [1, 1]} : vector<8x342xf32> to vector<8x288xf32>
    %18 = vector.extract_strided_slice %3 {offsets = [0, 18], sizes = [8, 288], strides = [1, 1]} : vector<8x342xf32> to vector<8x288xf32>
    %19 = vector.extract_strided_slice %3 {offsets = [0, 19], sizes = [8, 288], strides = [1, 1]} : vector<8x342xf32> to vector<8x288xf32>
    %20 = vector.extract_strided_slice %3 {offsets = [0, 20], sizes = [8, 288], strides = [1, 1]} : vector<8x342xf32> to vector<8x288xf32>
    %21 = vector.extract_strided_slice %3 {offsets = [0, 36], sizes = [8, 288], strides = [1, 1]} : vector<8x342xf32> to vector<8x288xf32>
    %22 = vector.extract_strided_slice %3 {offsets = [0, 37], sizes = [8, 288], strides = [1, 1]} : vector<8x342xf32> to vector<8x288xf32>
    %23 = vector.extract_strided_slice %3 {offsets = [0, 38], sizes = [8, 288], strides = [1, 1]} : vector<8x342xf32> to vector<8x288xf32>
    %24 = vector.extract_strided_slice %5 {offsets = [0, 0], sizes = [8, 288], strides = [1, 1]} : vector<8x342xf32> to vector<8x288xf32>
    %25 = vector.extract_strided_slice %5 {offsets = [0, 1], sizes = [8, 288], strides = [1, 1]} : vector<8x342xf32> to vector<8x288xf32>
    %26 = vector.extract_strided_slice %5 {offsets = [0, 2], sizes = [8, 288], strides = [1, 1]} : vector<8x342xf32> to vector<8x288xf32>
    %27 = vector.extract_strided_slice %5 {offsets = [0, 18], sizes = [8, 288], strides = [1, 1]} : vector<8x342xf32> to vector<8x288xf32>
    %28 = vector.extract_strided_slice %5 {offsets = [0, 19], sizes = [8, 288], strides = [1, 1]} : vector<8x342xf32> to vector<8x288xf32>
    %29 = vector.extract_strided_slice %5 {offsets = [0, 20], sizes = [8, 288], strides = [1, 1]} : vector<8x342xf32> to vector<8x288xf32>
    %30 = vector.extract_strided_slice %5 {offsets = [0, 36], sizes = [8, 288], strides = [1, 1]} : vector<8x342xf32> to vector<8x288xf32>
    %31 = vector.extract_strided_slice %5 {offsets = [0, 37], sizes = [8, 288], strides = [1, 1]} : vector<8x342xf32> to vector<8x288xf32>
    %32 = vector.extract_strided_slice %5 {offsets = [0, 38], sizes = [8, 288], strides = [1, 1]} : vector<8x342xf32> to vector<8x288xf32>
    %33 = tpu.concatenate %6, %7, %8, %9, %10, %11, %12, %13, %14, %15, %16, %17, %18, %19, %20, %21 in 0 : vector<8x288xf32>, vector<8x288xf32>, vector<8x288xf32>, vector<8x288xf32>, vector<8x288xf32>, vector<8x288xf32>, vector<8x288xf32>, vector<8x288xf32>, vector<8x288xf32>, vector<8x288xf32>, vector<8x288xf32>, vector<8x288xf32>, vector<8x288xf32>, vector<8x288xf32>, vector<8x288xf32>, vector<8x288xf32> -> vector<128x288xf32>
    %34 = tpu.concatenate %22, %23, %24, %25, %26, %27, %28, %29, %30, %31, %32 in 0 : vector<8x288xf32>, vector<8x288xf32>, vector<8x288xf32>, vector<8x288xf32>, vector<8x288xf32>, vector<8x288xf32>, vector<8x288xf32>, vector<8x288xf32>, vector<8x288xf32>, vector<8x288xf32>, vector<8x288xf32> -> vector<88x288xf32>
    %35 = tpu.concatenate %33, %34 in 0 : vector<128x288xf32>, vector<88x288xf32> -> vector<216x288xf32>
    %c0_11 = arith.constant 0 : index
    %c0_12 = arith.constant 0 : index
    %36 = vector.load %arg5[%c0_11, %c0_12] : memref<8x216xbf16, #tpu.memory_space<vmem>>, vector<8x216xbf16>
    %37 = arith.truncf %35 : vector<216x288xf32> to vector<216x288xbf16>
    %cst = arith.constant dense<0.000000e+00> : vector<8x288xf32>
    %38 = tpu.matmul %36, %37, %cst {dimension_numbers = #tpu.dot_dimension_numbers<[1], [0], [0], [1], [0, 0, 1, 1], [], []>} : vector<8x216xbf16>, vector<216x288xbf16>, vector<8x288xf32> -> vector<8x288xf32>
    %39 = tpu.iota {dimensions = array<i32: 1>} : vector<1x288xi32>
    %c18_i32 = arith.constant 18 : i32
    %c0_i32 = arith.constant 0 : i32
    %40 = arith.cmpi eq, %c18_i32, %c0_i32 : i32
    %c1_i32 = arith.constant 1 : i32
    %41 = arith.select %40, %c1_i32, %c18_i32 : i32
    %42 = vector.broadcast %41 : i32 to vector<1x288xi32>
    %43 = arith.remsi %39, %42 : vector<1x288xi32>
    %c0_i32_13 = arith.constant 0 : i32
    %44 = vector.broadcast %c0_i32_13 : i32 to vector<1x288xi32>
    %45 = arith.cmpi ne, %43, %44 : vector<1x288xi32>
    %c0_i32_14 = arith.constant 0 : i32
    %46 = vector.broadcast %c0_i32_14 : i32 to vector<1x288xi32>
    %47 = arith.cmpi slt, %43, %46 : vector<1x288xi32>
    %c0_i32_15 = arith.constant 0 : i32
    %48 = arith.cmpi slt, %41, %c0_i32_15 : i32
    %49 = vector.broadcast %48 : i1 to vector<1x288xi1>
    %50 = vector.broadcast %49 : vector<1x288xi1> to vector<1x288xi1>
    %51 = arith.xori %47, %50 : vector<1x288xi1>
    %52 = arith.andi %51, %45 : vector<1x288xi1>
    %53 = vector.broadcast %41 : i32 to vector<1x288xi32>
    %54 = arith.addi %43, %53 : vector<1x288xi32>
    %55 = arith.select %52, %54, %43 : vector<1x288xi1>, vector<1x288xi32>
    %c16_i32 = arith.constant 16 : i32
    %56 = vector.broadcast %c16_i32 : i32 to vector<1x288xi32>
    %57 = arith.cmpi slt, %55, %56 : vector<1x288xi32>
    %58 = arith.extui %57 : vector<1x288xi1> to vector<1x288xi32>
    %59 = arith.sitofp %58 : vector<1x288xi32> to vector<1x288xf32>
    %60 = vector.broadcast %59 : vector<1x288xf32> to vector<8x288xf32>
    %61 = arith.mulf %38, %60 : vector<8x288xf32>
    %cst_16 = arith.constant dense<0.000000e+00> : vector<8xf32>
    %62 = vector.multi_reduction <add>, %61, %cst_16 [1] : vector<8x288xf32> to vector<8xf32>
    %63 = vector.shape_cast %62 : vector<8xf32> to vector<8x1xf32>
    %c0_17 = arith.constant 0 : index
    %c0_18 = arith.constant 0 : index
    %c0_19 = arith.constant 0 : index
    %c0_20 = arith.constant 0 : index
    %64 = vector.load %arg6[%c0_17, %c0_18, %c0_19, %c0_20] : memref<1x1x8x1xf32, #tpu.memory_space<vmem>>, vector<1x1x8x1xf32>
    %65 = vector.shape_cast %64 : vector<1x1x8x1xf32> to vector<8x1xf32>
    %66 = vector.shape_cast %63 : vector<8x1xf32> to vector<1x1x8x1xf32>
    tpu.vector_store %arg6[%c0_17, %c0_18, %c0_19, %c0_20], %66 {strides = array<i32>} : memref<1x1x8x1xf32, #tpu.memory_space<vmem>>, vector<1x1x8x1xf32>,
    %67 = arith.mulf %61, %38 : vector<8x288xf32>
    %cst_21 = arith.constant dense<0.000000e+00> : vector<8xf32>
    %68 = vector.multi_reduction <add>, %67, %cst_21 [1] : vector<8x288xf32> to vector<8xf32>
    %69 = vector.shape_cast %68 : vector<8xf32> to vector<8x1xf32>
    %c0_22 = arith.constant 0 : index
    %c0_23 = arith.constant 0 : index
    %c0_24 = arith.constant 0 : index
    %c0_25 = arith.constant 0 : index
    %70 = vector.load %arg7[%c0_22, %c0_23, %c0_24, %c0_25] : memref<1x1x8x1xf32, #tpu.memory_space<vmem>>, vector<1x1x8x1xf32>
    %71 = vector.shape_cast %70 : vector<1x1x8x1xf32> to vector<8x1xf32>
    %72 = vector.shape_cast %69 : vector<8x1xf32> to vector<1x1x8x1xf32>
    tpu.vector_store %arg7[%c0_22, %c0_23, %c0_24, %c0_25], %72 {strides = array<i32>} : memref<1x1x8x1xf32, #tpu.memory_space<vmem>>, vector<1x1x8x1xf32>,
    return
  }
  func.func @transform_0(%arg0: i32, %arg1: i32) -> (i32, i32, i32, i32) {
    %c0_i32 = arith.constant 0 : i32
    %0 = arith.addi %arg1, %c0_i32 : i32
    %c0_i32_0 = arith.constant 0 : i32
    %c0_i32_1 = arith.constant 0 : i32
    %c0_i32_2 = arith.constant 0 : i32
    return %arg0, %0, %c0_i32_0, %c0_i32_1 : i32, i32, i32, i32
  }
  func.func @transform_1(%arg0: i32, %arg1: i32) -> (i32, i32, i32, i32) {
    %c1_i32 = arith.constant 1 : i32
    %0 = arith.addi %arg1, %c1_i32 : i32
    %c0_i32 = arith.constant 0 : i32
    %c0_i32_0 = arith.constant 0 : i32
    %c0_i32_1 = arith.constant 0 : i32
    return %arg0, %0, %c0_i32, %c0_i32_0 : i32, i32, i32, i32
  }
  func.func @transform_2(%arg0: i32, %arg1: i32) -> (i32, i32, i32, i32) {
    %c2_i32 = arith.constant 2 : i32
    %0 = arith.addi %arg1, %c2_i32 : i32
    %c0_i32 = arith.constant 0 : i32
    %c0_i32_0 = arith.constant 0 : i32
    %c0_i32_1 = arith.constant 0 : i32
    return %arg0, %0, %c0_i32, %c0_i32_0 : i32, i32, i32, i32
  }
  func.func @transform_3(%arg0: i32, %arg1: i32) -> (i32, i32) {
    %c0_i32 = arith.constant 0 : i32
    %c0_i32_0 = arith.constant 0 : i32
    %c0_i32_1 = arith.constant 0 : i32
    return %c0_i32, %c0_i32_0 : i32, i32
  }
  func.func @transform_4(%arg0: i32, %arg1: i32) -> (i32, i32, i32, i32) {
    %c0_i32 = arith.constant 0 : i32
    %c0_i32_0 = arith.constant 0 : i32
    %c0_i32_1 = arith.constant 0 : i32
    return %arg0, %arg1, %c0_i32, %c0_i32_0 : i32, i32, i32, i32
  }
  func.func @transform_5(%arg0: i32, %arg1: i32) -> (i32, i32, i32, i32) {
    %c0_i32 = arith.constant 0 : i32
    %c0_i32_0 = arith.constant 0 : i32
    %c0_i32_1 = arith.constant 0 : i32
    return %arg0, %arg1, %c0_i32, %c0_i32_0 : i32, i32, i32, i32
  }
}

module attributes {stable_mosaic.version = 11 : i64} {
  func.func @conv_bn_lrelu_kernel(%arg0: i32, %arg1: i32, %arg2: memref<1x1x8x342xf32, #tpu.memory_space<vmem>>, %arg3: memref<1x1x8x342xf32, #tpu.memory_space<vmem>>, %arg4: memref<1x1x8x342xf32, #tpu.memory_space<vmem>>, %arg5: memref<8x216xbf16, #tpu.memory_space<vmem>>, %arg6: memref<8x1xf32, #tpu.memory_space<vmem>>, %arg7: memref<8x1xf32, #tpu.memory_space<vmem>>, %arg8: memref<1x1x8x288xf32, #tpu.memory_space<vmem>>) attributes {dimension_semantics = [#tpu.dimension_semantics<parallel>, #tpu.dimension_semantics<parallel>], iteration_bounds = array<i64: 2, 8>, scalar_prefetch = 0 : i64, scratch_operands = 0 : i64, tpu.core_type = #tpu.core_type<tc>, window_params = [{transform_indices = @transform_0, window_bounds = array<i64: 1, 1, 8, 342>}, {transform_indices = @transform_1, window_bounds = array<i64: 1, 1, 8, 342>}, {transform_indices = @transform_2, window_bounds = array<i64: 1, 1, 8, 342>}, {pipeline_mode = #tpu.pipeline_mode<synchronous>, transform_indices = @transform_3, window_bounds = array<i64: 8, 216>}, {pipeline_mode = #tpu.pipeline_mode<synchronous>, transform_indices = @transform_4, window_bounds = array<i64: 8, 1>}, {pipeline_mode = #tpu.pipeline_mode<synchronous>, transform_indices = @transform_5, window_bounds = array<i64: 8, 1>}, {transform_indices = @transform_6, window_bounds = array<i64: 1, 1, 8, 288>}]} {
    %c0 = arith.constant 0 : index
    %c0_0 = arith.constant 0 : index
    %c0_1 = arith.constant 0 : index
    %c0_2 = arith.constant 0 : index
    %0 = vector.load %arg2[%c0, %c0_0, %c0_1, %c0_2] : memref<1x1x8x342xf32, #tpu.memory_space<vmem>>, vector<1x1x8x342xf32>
    %1 = vector.shape_cast %0 : vector<1x1x8x342xf32> to vector<8x342xf32>
    %c0_3 = arith.constant 0 : index
    %c0_4 = arith.constant 0 : index
    %c0_5 = arith.constant 0 : index
    %c0_6 = arith.constant 0 : index
    %2 = vector.load %arg3[%c0_3, %c0_4, %c0_5, %c0_6] : memref<1x1x8x342xf32, #tpu.memory_space<vmem>>, vector<1x1x8x342xf32>
    %3 = vector.shape_cast %2 : vector<1x1x8x342xf32> to vector<8x342xf32>
    %c0_7 = arith.constant 0 : index
    %c0_8 = arith.constant 0 : index
    %c0_9 = arith.constant 0 : index
    %c0_10 = arith.constant 0 : index
    %4 = vector.load %arg4[%c0_7, %c0_8, %c0_9, %c0_10] : memref<1x1x8x342xf32, #tpu.memory_space<vmem>>, vector<1x1x8x342xf32>
    %5 = vector.shape_cast %4 : vector<1x1x8x342xf32> to vector<8x342xf32>
    %6 = vector.extract_strided_slice %1 {offsets = [0, 0], sizes = [8, 288], strides = [1, 1]} : vector<8x342xf32> to vector<8x288xf32>
    %7 = vector.extract_strided_slice %1 {offsets = [0, 1], sizes = [8, 288], strides = [1, 1]} : vector<8x342xf32> to vector<8x288xf32>
    %8 = vector.extract_strided_slice %1 {offsets = [0, 2], sizes = [8, 288], strides = [1, 1]} : vector<8x342xf32> to vector<8x288xf32>
    %9 = vector.extract_strided_slice %1 {offsets = [0, 18], sizes = [8, 288], strides = [1, 1]} : vector<8x342xf32> to vector<8x288xf32>
    %10 = vector.extract_strided_slice %1 {offsets = [0, 19], sizes = [8, 288], strides = [1, 1]} : vector<8x342xf32> to vector<8x288xf32>
    %11 = vector.extract_strided_slice %1 {offsets = [0, 20], sizes = [8, 288], strides = [1, 1]} : vector<8x342xf32> to vector<8x288xf32>
    %12 = vector.extract_strided_slice %1 {offsets = [0, 36], sizes = [8, 288], strides = [1, 1]} : vector<8x342xf32> to vector<8x288xf32>
    %13 = vector.extract_strided_slice %1 {offsets = [0, 37], sizes = [8, 288], strides = [1, 1]} : vector<8x342xf32> to vector<8x288xf32>
    %14 = vector.extract_strided_slice %1 {offsets = [0, 38], sizes = [8, 288], strides = [1, 1]} : vector<8x342xf32> to vector<8x288xf32>
    %15 = vector.extract_strided_slice %3 {offsets = [0, 0], sizes = [8, 288], strides = [1, 1]} : vector<8x342xf32> to vector<8x288xf32>
    %16 = vector.extract_strided_slice %3 {offsets = [0, 1], sizes = [8, 288], strides = [1, 1]} : vector<8x342xf32> to vector<8x288xf32>
    %17 = vector.extract_strided_slice %3 {offsets = [0, 2], sizes = [8, 288], strides = [1, 1]} : vector<8x342xf32> to vector<8x288xf32>
    %18 = vector.extract_strided_slice %3 {offsets = [0, 18], sizes = [8, 288], strides = [1, 1]} : vector<8x342xf32> to vector<8x288xf32>
    %19 = vector.extract_strided_slice %3 {offsets = [0, 19], sizes = [8, 288], strides = [1, 1]} : vector<8x342xf32> to vector<8x288xf32>
    %20 = vector.extract_strided_slice %3 {offsets = [0, 20], sizes = [8, 288], strides = [1, 1]} : vector<8x342xf32> to vector<8x288xf32>
    %21 = vector.extract_strided_slice %3 {offsets = [0, 36], sizes = [8, 288], strides = [1, 1]} : vector<8x342xf32> to vector<8x288xf32>
    %22 = vector.extract_strided_slice %3 {offsets = [0, 37], sizes = [8, 288], strides = [1, 1]} : vector<8x342xf32> to vector<8x288xf32>
    %23 = vector.extract_strided_slice %3 {offsets = [0, 38], sizes = [8, 288], strides = [1, 1]} : vector<8x342xf32> to vector<8x288xf32>
    %24 = vector.extract_strided_slice %5 {offsets = [0, 0], sizes = [8, 288], strides = [1, 1]} : vector<8x342xf32> to vector<8x288xf32>
    %25 = vector.extract_strided_slice %5 {offsets = [0, 1], sizes = [8, 288], strides = [1, 1]} : vector<8x342xf32> to vector<8x288xf32>
    %26 = vector.extract_strided_slice %5 {offsets = [0, 2], sizes = [8, 288], strides = [1, 1]} : vector<8x342xf32> to vector<8x288xf32>
    %27 = vector.extract_strided_slice %5 {offsets = [0, 18], sizes = [8, 288], strides = [1, 1]} : vector<8x342xf32> to vector<8x288xf32>
    %28 = vector.extract_strided_slice %5 {offsets = [0, 19], sizes = [8, 288], strides = [1, 1]} : vector<8x342xf32> to vector<8x288xf32>
    %29 = vector.extract_strided_slice %5 {offsets = [0, 20], sizes = [8, 288], strides = [1, 1]} : vector<8x342xf32> to vector<8x288xf32>
    %30 = vector.extract_strided_slice %5 {offsets = [0, 36], sizes = [8, 288], strides = [1, 1]} : vector<8x342xf32> to vector<8x288xf32>
    %31 = vector.extract_strided_slice %5 {offsets = [0, 37], sizes = [8, 288], strides = [1, 1]} : vector<8x342xf32> to vector<8x288xf32>
    %32 = vector.extract_strided_slice %5 {offsets = [0, 38], sizes = [8, 288], strides = [1, 1]} : vector<8x342xf32> to vector<8x288xf32>
    %33 = tpu.concatenate %6, %7, %8, %9, %10, %11, %12, %13, %14, %15, %16, %17, %18, %19, %20, %21 in 0 : vector<8x288xf32>, vector<8x288xf32>, vector<8x288xf32>, vector<8x288xf32>, vector<8x288xf32>, vector<8x288xf32>, vector<8x288xf32>, vector<8x288xf32>, vector<8x288xf32>, vector<8x288xf32>, vector<8x288xf32>, vector<8x288xf32>, vector<8x288xf32>, vector<8x288xf32>, vector<8x288xf32>, vector<8x288xf32> -> vector<128x288xf32>
    %34 = tpu.concatenate %22, %23, %24, %25, %26, %27, %28, %29, %30, %31, %32 in 0 : vector<8x288xf32>, vector<8x288xf32>, vector<8x288xf32>, vector<8x288xf32>, vector<8x288xf32>, vector<8x288xf32>, vector<8x288xf32>, vector<8x288xf32>, vector<8x288xf32>, vector<8x288xf32>, vector<8x288xf32> -> vector<88x288xf32>
    %35 = tpu.concatenate %33, %34 in 0 : vector<128x288xf32>, vector<88x288xf32> -> vector<216x288xf32>
    %c0_11 = arith.constant 0 : index
    %c0_12 = arith.constant 0 : index
    %36 = vector.load %arg5[%c0_11, %c0_12] : memref<8x216xbf16, #tpu.memory_space<vmem>>, vector<8x216xbf16>
    %37 = arith.truncf %35 : vector<216x288xf32> to vector<216x288xbf16>
    %cst = arith.constant dense<0.000000e+00> : vector<8x288xf32>
    %38 = tpu.matmul %36, %37, %cst {dimension_numbers = #tpu.dot_dimension_numbers<[1], [0], [0], [1], [0, 0, 1, 1], [], []>} : vector<8x216xbf16>, vector<216x288xbf16>, vector<8x288xf32> -> vector<8x288xf32>
    %c0_13 = arith.constant 0 : index
    %c0_14 = arith.constant 0 : index
    %39 = vector.load %arg6[%c0_13, %c0_14] : memref<8x1xf32, #tpu.memory_space<vmem>>, vector<8x1xf32>
    %40 = vector.broadcast %39 : vector<8x1xf32> to vector<8x288xf32>
    %41 = arith.mulf %38, %40 : vector<8x288xf32>
    %c0_15 = arith.constant 0 : index
    %c0_16 = arith.constant 0 : index
    %42 = vector.load %arg7[%c0_15, %c0_16] : memref<8x1xf32, #tpu.memory_space<vmem>>, vector<8x1xf32>
    %43 = vector.broadcast %42 : vector<8x1xf32> to vector<8x288xf32>
    %44 = arith.addf %41, %43 : vector<8x288xf32>
    %cst_17 = arith.constant 0.000000e+00 : f32
    %45 = vector.broadcast %cst_17 : f32 to vector<8x288xf32>
    %46 = arith.cmpf oge, %44, %45 : vector<8x288xf32>
    %cst_18 = arith.constant 0.00999999977 : f32
    %47 = vector.broadcast %cst_18 : f32 to vector<8x288xf32>
    %48 = arith.mulf %47, %44 : vector<8x288xf32>
    %49 = arith.select %46, %44, %48 : vector<8x288xi1>, vector<8x288xf32>
    %c0_19 = arith.constant 0 : index
    %c0_20 = arith.constant 0 : index
    %c0_21 = arith.constant 0 : index
    %c0_22 = arith.constant 0 : index
    %50 = vector.load %arg8[%c0_19, %c0_20, %c0_21, %c0_22] : memref<1x1x8x288xf32, #tpu.memory_space<vmem>>, vector<1x1x8x288xf32>
    %51 = vector.shape_cast %50 : vector<1x1x8x288xf32> to vector<8x288xf32>
    %52 = vector.shape_cast %49 : vector<8x288xf32> to vector<1x1x8x288xf32>
    tpu.vector_store %arg8[%c0_19, %c0_20, %c0_21, %c0_22], %52 {strides = array<i32>} : memref<1x1x8x288xf32, #tpu.memory_space<vmem>>, vector<1x1x8x288xf32>,
    return
  }
  func.func @transform_0(%arg0: i32, %arg1: i32) -> (i32, i32, i32, i32) {
    %c0_i32 = arith.constant 0 : i32
    %0 = arith.addi %arg1, %c0_i32 : i32
    %c0_i32_0 = arith.constant 0 : i32
    %c0_i32_1 = arith.constant 0 : i32
    %c0_i32_2 = arith.constant 0 : i32
    return %arg0, %0, %c0_i32_0, %c0_i32_1 : i32, i32, i32, i32
  }
  func.func @transform_1(%arg0: i32, %arg1: i32) -> (i32, i32, i32, i32) {
    %c1_i32 = arith.constant 1 : i32
    %0 = arith.addi %arg1, %c1_i32 : i32
    %c0_i32 = arith.constant 0 : i32
    %c0_i32_0 = arith.constant 0 : i32
    %c0_i32_1 = arith.constant 0 : i32
    return %arg0, %0, %c0_i32, %c0_i32_0 : i32, i32, i32, i32
  }
  func.func @transform_2(%arg0: i32, %arg1: i32) -> (i32, i32, i32, i32) {
    %c2_i32 = arith.constant 2 : i32
    %0 = arith.addi %arg1, %c2_i32 : i32
    %c0_i32 = arith.constant 0 : i32
    %c0_i32_0 = arith.constant 0 : i32
    %c0_i32_1 = arith.constant 0 : i32
    return %arg0, %0, %c0_i32, %c0_i32_0 : i32, i32, i32, i32
  }
  func.func @transform_3(%arg0: i32, %arg1: i32) -> (i32, i32) {
    %c0_i32 = arith.constant 0 : i32
    %c0_i32_0 = arith.constant 0 : i32
    %c0_i32_1 = arith.constant 0 : i32
    return %c0_i32, %c0_i32_0 : i32, i32
  }
  func.func @transform_4(%arg0: i32, %arg1: i32) -> (i32, i32) {
    %c0_i32 = arith.constant 0 : i32
    %c0_i32_0 = arith.constant 0 : i32
    %c0_i32_1 = arith.constant 0 : i32
    return %c0_i32, %c0_i32_0 : i32, i32
  }
  func.func @transform_5(%arg0: i32, %arg1: i32) -> (i32, i32) {
    %c0_i32 = arith.constant 0 : i32
    %c0_i32_0 = arith.constant 0 : i32
    %c0_i32_1 = arith.constant 0 : i32
    return %c0_i32, %c0_i32_0 : i32, i32
  }
  func.func @transform_6(%arg0: i32, %arg1: i32) -> (i32, i32, i32, i32) {
    %c0_i32 = arith.constant 0 : i32
    %c0_i32_0 = arith.constant 0 : i32
    %c0_i32_1 = arith.constant 0 : i32
    return %arg0, %arg1, %c0_i32, %c0_i32_0 : i32, i32, i32, i32
  }
}

</mosaic_0001>

<llo_original>
// kernel: basic_conv3d.3
$region0: #{basic_conv3d.3}
  #allocation0 [shape = 'u32[]', space=smem, size = 0x4, offset = 0x4, fixed_abs, tag = 'smem constant byte address 0x4 - core index']
  #allocation1 [shape = 'u32[144,128]{1,0:T(1,128)}', space=vmem, size = 0x12000, scoped, tag = 'internal scratch']
  %s0 = inlined_call_operand.vmem [shape: f32[2,10,8,342], index: 0, kind: input, shape index: {}, may-alias: {0,1,2}]
  %s1 = inlined_call_operand.vmem [shape: f32[2,10,8,342], index: 1, kind: input, shape index: {}, may-alias: {0,1,2}]
  %s2 = inlined_call_operand.vmem [shape: f32[2,10,8,342], index: 2, kind: input, shape index: {}, may-alias: {0,1,2}]
  %s3 = inlined_call_operand.vmem [shape: bf16[8,216], index: 3, kind: input, shape index: {}]
  %s4 = inlined_call_operand.vmem [shape: f32[8,1], index: 4, kind: input, shape index: {}]
  %s5 = inlined_call_operand.vmem [shape: f32[8,1], index: 5, kind: input, shape index: {}]
  %s6 = inlined_call_operand.vmem [shape: f32[2,8,8,288], index: 6, kind: output, shape index: {}]
  %s7 = sld [smem:[#allocation0]]
  $region57: #{basic_conv3d.3} parent=0
    _
  %s9 = ssub.s32 1, %s7
  %s10 = scalar_select 0, %s9, %s7
  loop: start=0, step=1, limit=18
  $region2: #{basic_conv3d.3} parent=0 // loop_pre_header
    _
  $region3: #{basic_conv3d.3} parent=0 // loop_header
    %s12 = sphi 0, %s16
    %p13 = scmp.ge.s32.totalorder %s12, 18
    %s19 = sphi 0, %s31
    %s20 = sphi 0, %s27
    %s21 = sphi 0, %s19
    %s22 = sphi 0, %s20
    %s23 = sphi 0, %s21
    %s24 = sphi 0, %s22
    %s36 = sphi 0, %s38
    %s39 = sphi 0, %s36
    %s40 = sphi 0, %s39
    %s56 = sphi 0, %s40
    %s66 = sphi 0, %s68
    %s69 = sphi 0, %s66
    %s70 = sphi 0, %s69
    %s86 = sphi 0, %s70
    %s96 = sphi 0, %s98
    %s99 = sphi 0, %s96
    %s100 = sphi 0, %s99
    %s116 = sphi 0, %s100
    %s120 = sphi 0, %s120
    %s122 = sphi 0, %s120
    %s123 = sphi 0, %s122
    %s137 = sphi 0, %s123
    %s141 = sphi 0, %s141
    %s143 = sphi 0, %s141
    %s144 = sphi 0, %s143
    %s158 = sphi 0, %s144
    %s162 = sphi 0, %s162
    %s164 = sphi 0, %s162
    %s165 = sphi 0, %s164
    %s179 = sphi 0, %s165
    %s187 = sphi 0, %s189
    %s190 = sphi 0, %s187
    %s191 = sphi 0, %s190
    %s207 = sphi 0, %s191
  $region4: #{basic_conv3d.3} parent=0 // loop_header_branch
    %15 = sbr.rel (%p13) target = $region8
  $region5: #{basic_conv3d.3} parent=0 // loop_body
    %s17 = ssub.s32 %s12, 1
    %s18 = ssub.s32 %s12, 2
    %s25 = sadd.s32 1, %s20
    %p26 = scmp.ge.s32.totalorder %s25, 8
    %s27 = scalar_select %p26, 0, %s25
    %s28 = sadd.s32 1, %s19
    %s29 = scalar_select %p26, %s28, %s19
    %p30 = scmp.ge.s32.totalorder %s29, 2
    %s31 = scalar_select %p30, 0, %s29
    %s32 = ssub.s32 %s19, %s31
    %s33 = ssub.s32 %s20, %s27
    %s34 = sor.u32 %s32, %s33
    %p35 = scmp.eq.s32.totalorder %s34, 0
    %s37 = sadd.s32 %s36, 1
    %s38 = scalar_select %p35, %s36, %s37
    %p41 = pneg %p35
    %p42 = scmp.eq.s32.totalorder %s12, 15
    %p43 = por %p41, %p42
    %p44 = scmp.ne.s32.totalorder %s36, %s39
    %p45 = scmp.eq.s32.totalorder %s12, 0
    %p46 = por %p44, %p45
    %p47 = scmp.ne.s32.totalorder %s36, %s39
    %p48 = scmp.eq.s32.totalorder %s17, 15
    %p49 = por %p47, %p48
    %p50 = scmp.ne.s32.totalorder %s39, %s40
    %p51 = scmp.eq.s32.totalorder %s17, 0
    %p52 = por %p50, %p51
    %p53 = scmp.ne.s32.totalorder %s39, %s40
    %p54 = scmp.eq.s32.totalorder %s18, 15
    %p55 = por %p53, %p54
    %p57 = scmp.ne.s32.totalorder %s40, %s56
    %p58 = scmp.eq.s32.totalorder %s18, 0
    %p59 = por %p57, %p58
    %s60 = sadd.s32 %s20, 1
    %s61 = sadd.s32 %s27, 1
    %s62 = ssub.s32 %s19, %s31
    %s63 = ssub.s32 %s60, %s61
    %s64 = sor.u32 %s62, %s63
    %p65 = scmp.eq.s32.totalorder %s64, 0
    %s67 = sadd.s32 %s66, 1
    %s68 = scalar_select %p65, %s66, %s67
    %p71 = pneg %p65
    %p72 = scmp.eq.s32.totalorder %s12, 15
    %p73 = por %p71, %p72
    %p74 = scmp.ne.s32.totalorder %s66, %s69
    %p75 = scmp.eq.s32.totalorder %s12, 0
    %p76 = por %p74, %p75
    %p77 = scmp.ne.s32.totalorder %s66, %s69
    %p78 = scmp.eq.s32.totalorder %s17, 15
    %p79 = por %p77, %p78
    %p80 = scmp.ne.s32.totalorder %s69, %s70
    %p81 = scmp.eq.s32.totalorder %s17, 0
    %p82 = por %p80, %p81
    %p83 = scmp.ne.s32.totalorder %s69, %s70
    %p84 = scmp.eq.s32.totalorder %s18, 15
    %p85 = por %p83, %p84
    %p87 = scmp.ne.s32.totalorder %s70, %s86
    %p88 = scmp.eq.s32.totalorder %s18, 0
    %p89 = por %p87, %p88
    %s90 = sadd.s32 %s20, 2
    %s91 = sadd.s32 %s27, 2
    %s92 = ssub.s32 %s19, %s31
    %s93 = ssub.s32 %s90, %s91
    %s94 = sor.u32 %s92, %s93
    %p95 = scmp.eq.s32.totalorder %s94, 0
    %s97 = sadd.s32 %s96, 1
    %s98 = scalar_select %p95, %s96, %s97
    %p101 = pneg %p95
    %p102 = scmp.eq.s32.totalorder %s12, 15
    %p103 = por %p101, %p102
    %p104 = scmp.ne.s32.totalorder %s96, %s99
    %p105 = scmp.eq.s32.totalorder %s12, 0
    %p106 = por %p104, %p105
    %p107 = scmp.ne.s32.totalorder %s96, %s99
    %p108 = scmp.eq.s32.totalorder %s17, 15
    %p109 = por %p107, %p108
    %p110 = scmp.ne.s32.totalorder %s99, %s100
    %p111 = scmp.eq.s32.totalorder %s17, 0
    %p112 = por %p110, %p111
    %p113 = scmp.ne.s32.totalorder %s99, %s100
    %p114 = scmp.eq.s32.totalorder %s18, 15
    %p115 = por %p113, %p114
    %p117 = scmp.ne.s32.totalorder %s100, %s116
    %p118 = scmp.eq.s32.totalorder %s18, 0
    %p119 = por %p117, %p118
    %s121 = sadd.s32 %s120, 1
    %p124 = scmp.eq.s32.totalorder %s12, 15
    %p125 = scmp.ne.s32.totalorder %s120, %s122
    %p126 = scmp.eq.s32.totalorder %s12, 0
    %p127 = por %p125, %p126
    %p128 = scmp.ne.s32.totalorder %s120, %s122
    %p129 = scmp.eq.s32.totalorder %s17, 15
    %p130 = por %p128, %p129
    %p131 = scmp.ne.s32.totalorder %s122, %s123
    %p132 = scmp.eq.s32.totalorder %s17, 0
    %p133 = por %p131, %p132
    %p134 = scmp.ne.s32.totalorder %s122, %s123
    %p135 = scmp.eq.s32.totalorder %s18, 15
    %p136 = por %p134, %p135
    %p138 = scmp.ne.s32.totalorder %s123, %s137
    %p139 = scmp.eq.s32.totalorder %s18, 0
    %p140 = por %p138, %p139
    %s142 = sadd.s32 %s141, 1
    %p145 = scmp.eq.s32.totalorder %s12, 15
    %p146 = scmp.ne.s32.totalorder %s141, %s143
    %p147 = scmp.eq.s32.totalorder %s12, 0
    %p148 = por %p146, %p147
    %p149 = scmp.ne.s32.totalorder %s141, %s143
    %p150 = scmp.eq.s32.totalorder %s17, 15
    %p151 = por %p149, %p150
    %p152 = scmp.ne.s32.totalorder %s143, %s144
    %p153 = scmp.eq.s32.totalorder %s17, 0
    %p154 = por %p152, %p153
    %p155 = scmp.ne.s32.totalorder %s143, %s144
    %p156 = scmp.eq.s32.totalorder %s18, 15
    %p157 = por %p155, %p156
    %p159 = scmp.ne.s32.totalorder %s144, %s158
    %p160 = scmp.eq.s32.totalorder %s18, 0
    %p161 = por %p159, %p160
    %s163 = sadd.s32 %s162, 1
    %p166 = scmp.eq.s32.totalorder %s12, 15
    %p167 = scmp.ne.s32.totalorder %s162, %s164
    %p168 = scmp.eq.s32.totalorder %s12, 0
    %p169 = por %p167, %p168
    %p170 = scmp.ne.s32.totalorder %s162, %s164
    %p171 = scmp.eq.s32.totalorder %s17, 15
    %p172 = por %p170, %p171
    %p173 = scmp.ne.s32.totalorder %s164, %s165
    %p174 = scmp.eq.s32.totalorder %s17, 0
    %p175 = por %p173, %p174
    %p176 = scmp.ne.s32.totalorder %s164, %s165
    %p177 = scmp.eq.s32.totalorder %s18, 15
    %p178 = por %p176, %p177
    %p180 = scmp.ne.s32.totalorder %s165, %s179
    %p181 = scmp.eq.s32.totalorder %s18, 0
    %p182 = por %p180, %p181
    %s183 = ssub.s32 %s19, %s31
    %s184 = ssub.s32 %s20, %s27
    %s185 = sor.u32 %s183, %s184
    %p186 = scmp.eq.s32.totalorder %s185, 0
    %s188 = sadd.s32 %s187, 1
    %s189 = scalar_select %p186, %s187, %s188
    %p192 = pneg %p186
    %p193 = scmp.eq.s32.totalorder %s12, 15
    %p194 = por %p192, %p193
    %p195 = scmp.ne.s32.totalorder %s187, %s190
    %p196 = scmp.eq.s32.totalorder %s12, 0
    %p197 = por %p195, %p196
    %p198 = scmp.ne.s32.totalorder %s187, %s190
    %p199 = scmp.eq.s32.totalorder %s17, 15
    %p200 = por %p198, %p199
    %p201 = scmp.ne.s32.totalorder %s190, %s191
    %p202 = scmp.eq.s32.totalorder %s17, 0
    %p203 = por %p201, %p202
    %p204 = scmp.ne.s32.totalorder %s190, %s191
    %p205 = scmp.eq.s32.totalorder %s18, 15
    %p206 = por %p204, %p205
    %p208 = scmp.ne.s32.totalorder %s191, %s207
    %p209 = scmp.eq.s32.totalorder %s18, 0
    %p210 = por %p208, %p209
    %p211 = scmp.le.s32.totalorder 1, %s12
    %p212 = scmp.lt.s32.totalorder %s12, 17
    %p213 = pnand %p211, %p212
    %p214 = pneg %p213
    // Predicated region
    $region9: #{basic_conv3d.3} parent=5 // pred_check
      _
    $region10: #{basic_conv3d.3} parent=5 // pred_check_branch
      %216 = sbr.rel (%p213) target = $region12
    $region11: #{basic_conv3d.3} parent=5 // pred_region
      %s217 = ssub.s32 %s12, 1
      // Predicated region
      $region13: #{basic_conv3d.3} parent=11 // pred_check
        %p218 = pneg %p133
      $region14: #{basic_conv3d.3} parent=11 // pred_check_branch
        %220 = sbr.rel (%p218) target = $region16
      $region15: #{basic_conv3d.3} parent=11 // pred_region
        _
      $region16: #{basic_conv3d.3} parent=11 // pred_fallthru
        _
      // Predicated region
      $region17: #{basic_conv3d.3} parent=11 // pred_check
        %p221 = pneg %p154
      $region18: #{basic_conv3d.3} parent=11 // pred_check_branch
        %223 = sbr.rel (%p221) target = $region20
      $region19: #{basic_conv3d.3} parent=11 // pred_region
        _
      $region20: #{basic_conv3d.3} parent=11 // pred_fallthru
        _
      // Predicated region
      $region21: #{basic_conv3d.3} parent=11 // pred_check
        %p224 = pneg %p175
      $region22: #{basic_conv3d.3} parent=11 // pred_check_branch
        %226 = sbr.rel (%p224) target = $region24
      $region23: #{basic_conv3d.3} parent=11 // pred_region
        _
      $region24: #{basic_conv3d.3} parent=11 // pred_fallthru
        _
    $region12: #{basic_conv3d.3} parent=5 // pred_fallthru
      _
    %p227 = scmp.lt.s32.totalorder %s12, 16
    // Predicated region
    $region25: #{basic_conv3d.3} parent=5 // pred_check
      %p228 = pneg %p227
    $region26: #{basic_conv3d.3} parent=5 // pred_check_branch
      %230 = sbr.rel (%p228) target = $region28
    $region27: #{basic_conv3d.3} parent=5 // pred_region
      // Predicated region
      $region29: #{basic_conv3d.3} parent=27 // pred_check
        %p231 = pneg %p46
      $region30: #{basic_conv3d.3} parent=27 // pred_check_branch
        %233 = sbr.rel (%p231) target = $region32
      $region31: #{basic_conv3d.3} parent=27 // pred_region
        %p234 = scmp.lt.s32.totalorder %s19, 1
        %s235 = scalar_select %p234, %s19, 1
        %p236 = scmp.lt.s32.totalorder %s20, 9
        %s237 = scalar_select %p236, %s20, 9
        %s238 = smul.addr %s237, 3
        %s239 = smul.addr %s235, 30
        %s240 = sadd.s32 %s238, %s239
        %s241 = smul.addr %s240, 8
        %s242 = scalar_lea.vmem %s0, %s241
      $region32: #{basic_conv3d.3} parent=27 // pred_fallthru
        _
      // Predicated region
      $region33: #{basic_conv3d.3} parent=27 // pred_check
        %p243 = pneg %p76
      $region34: #{basic_conv3d.3} parent=27 // pred_check_branch
        %245 = sbr.rel (%p243) target = $region36
      $region35: #{basic_conv3d.3} parent=27 // pred_region
        %s246 = sadd.s32 %s20, 1
        %p247 = scmp.lt.s32.totalorder %s19, 1
        %s248 = scalar_select %p247, %s19, 1
        %p249 = scmp.lt.s32.totalorder %s246, 9
        %s250 = scalar_select %p249, %s246, 9
        %s251 = smul.addr %s250, 3
        %s252 = smul.addr %s248, 30
        %s253 = sadd.s32 %s251, %s252
        %s254 = smul.addr %s253, 8
        %s255 = scalar_lea.vmem %s1, %s254
        %s256 = sadd.s32 %s20, 1
      $region36: #{basic_conv3d.3} parent=27 // pred_fallthru
        _
      // Predicated region
      $region37: #{basic_conv3d.3} parent=27 // pred_check
        %p257 = pneg %p106
      $region38: #{basic_conv3d.3} parent=27 // pred_check_branch
        %259 = sbr.rel (%p257) target = $region40
      $region39: #{basic_conv3d.3} parent=27 // pred_region
        %s260 = sadd.s32 %s20, 2
        %p261 = scmp.lt.s32.totalorder %s19, 1
        %s262 = scalar_select %p261, %s19, 1
        %p263 = scmp.lt.s32.totalorder %s260, 9
        %s264 = scalar_select %p263, %s260, 9
        %s265 = smul.addr %s264, 3
        %s266 = smul.addr %s262, 30
        %s267 = sadd.s32 %s265, %s266
        %s268 = smul.addr %s267, 8
        %s269 = scalar_lea.vmem %s2, %s268
        %s270 = sadd.s32 %s20, 2
      $region40: #{basic_conv3d.3} parent=27 // pred_fallthru
        _
    $region28: #{basic_conv3d.3} parent=5 // pred_fallthru
      _
    %p271 = scmp.le.s32.totalorder 1, %s12
    %p272 = scmp.lt.s32.totalorder %s12, 17
    %p273 = pnand %p271, %p272
    %p274 = pneg %p273
    // Predicated region
    $region41: #{basic_conv3d.3} parent=5 // pred_check
      _
    $region42: #{basic_conv3d.3} parent=5 // pred_check_branch
      %276 = sbr.rel (%p273) target = $region44
    $region43: #{basic_conv3d.3} parent=5 // pred_region
      %s277 = ssub.s32 %s12, 1
      %p278 = scmp.lt.s32.totalorder %s21, 1
      %s279 = scalar_select %p278, %s21, 1
      %p280 = scmp.lt.s32.totalorder %s22, 9
      %s281 = scalar_select %p280, %s22, 9
      %s282 = smul.addr %s281, 3
      %s283 = smul.addr %s279, 30
      %s284 = sadd.s32 %s282, %s283
      %s285 = smul.addr %s284, 8
      %s286 = scalar_lea.vmem %s0, %s285
      %p287 = pneg %p52
      %p288 = pneg %p49
      %s289 = sadd.s32 %s22, 1
      %p290 = scmp.lt.s32.totalorder %s21, 1
      %s291 = scalar_select %p290, %s21, 1
      %p292 = scmp.lt.s32.totalorder %s289, 9
      %s293 = scalar_select %p292, %s289, 9
      %s294 = smul.addr %s293, 3
      %s295 = smul.addr %s291, 30
      %s296 = sadd.s32 %s294, %s295
      %s297 = smul.addr %s296, 8
      %s298 = scalar_lea.vmem %s1, %s297
      %p299 = pneg %p82
      %p300 = pneg %p79
      %s301 = sadd.s32 %s22, 2
      %p302 = scmp.lt.s32.totalorder %s21, 1
      %s303 = scalar_select %p302, %s21, 1
      %p304 = scmp.lt.s32.totalorder %s301, 9
      %s305 = scalar_select %p304, %s301, 9
      %s306 = smul.addr %s305, 3
      %s307 = smul.addr %s303, 30
      %s308 = sadd.s32 %s306, %s307
      %s309 = smul.addr %s308, 8
      %s310 = scalar_lea.vmem %s2, %s309
      %p311 = pneg %p112
      %p312 = pneg %p109
      %p313 = pneg %p133
      %p314 = pneg %p130
      %p315 = pneg %p154
      %p316 = pneg %p151
      %p317 = pneg %p175
      %p318 = pneg %p172
      %p319 = pneg %p203
      %p320 = pneg %p200
      %p321 = scmp.lt.s32.totalorder %s21, 1
      %s322 = scalar_select %p321, %s21, 1
      %p323 = scmp.lt.s32.totalorder %s22, 7
      %s324 = scalar_select %p323, %s22, 7
      %s325 = smul.addr %s324, 3
      %s326 = smul.addr %s322, 24
      %s327 = sadd.s32 %s325, %s326
      %s328 = smul.addr %s327, 8
      %s329 = scalar_lea.vmem %s6, %s328
      %p330 = scmp.lt.s32.totalorder %s21, 1
      %s331 = scalar_select %p330, %s21, 1
      %p332 = scmp.lt.s32.totalorder %s22, 9
      %s333 = scalar_select %p332, %s22, 9
      %s334 = smul.addr %s333, 3
      %s335 = smul.addr %s331, 30
      %s336 = sadd.s32 %s334, %s335
      %s337 = smul.addr %s336, 8
      %s338 = scalar_lea.vmem %s0, %s337
      %s339 = sadd.s32 %s22, 1
      %p340 = scmp.lt.s32.totalorder %s21, 1
      %s341 = scalar_select %p340, %s21, 1
      %p342 = scmp.lt.s32.totalorder %s339, 9
      %s343 = scalar_select %p342, %s339, 9
      %s344 = smul.addr %s343, 3
      %s345 = smul.addr %s341, 30
      %s346 = sadd.s32 %s344, %s345
      %s347 = smul.addr %s346, 8
      %s348 = scalar_lea.vmem %s1, %s347
      %s349 = sadd.s32 %s22, 1
      %s350 = sadd.s32 %s22, 2
      %p351 = scmp.lt.s32.totalorder %s21, 1
      %s352 = scalar_select %p351, %s21, 1
      %p353 = scmp.lt.s32.totalorder %s350, 9
      %s354 = scalar_select %p353, %s350, 9
      %s355 = smul.addr %s354, 3
      %s356 = smul.addr %s352, 30
      %s357 = sadd.s32 %s355, %s356
      %s358 = smul.addr %s357, 8
      %s359 = scalar_lea.vmem %s2, %s358
      %s360 = sadd.s32 %s22, 2
      %p361 = scmp.lt.s32.totalorder %s21, 1
      %s362 = scalar_select %p361, %s21, 1
      %p363 = scmp.lt.s32.totalorder %s22, 7
      %s364 = scalar_select %p363, %s22, 7
      %s365 = smul.addr %s364, 3
      %s366 = smul.addr %s362, 24
      %s367 = sadd.s32 %s365, %s366
      %s368 = smul.addr %s367, 8
      %s369 = scalar_lea.vmem %s6, %s368
      %v371 = vld [vmem:[%s338] sm:$0xff]
      %v372 = vld [vmem:[%s338 + $0x8] sm:$0xff]
      %v373 = vld [vmem:[%s338 + $0x10] sm:$0xff]
      %v374 = vld [vmem:[%s348] sm:$0xff]
      %v375 = vld [vmem:[%s348 + $0x8] sm:$0xff]
      %v376 = vld [vmem:[%s348 + $0x10] sm:$0xff]
      %v377 = vld [vmem:[%s359] sm:$0xff]
      %v378 = vld [vmem:[%s359 + $0x8] sm:$0xff]
      %v379 = vld [vmem:[%s359 + $0x10] sm:$0xff]
      %383 = vrot.lane.b32.xlu0 %v371, 127
      %v384 = vpop.permute.xlu0 %383
      %385 = vrot.lane.b32.xlu0 %v372, 127
      %v386 = vpop.permute.xlu0 %385
      %387 = vrot.lane.b32.xlu0 %v373, 127
      %v388 = vpop.permute.xlu0 %387
      %vm389 = vcmask 1039360
      %v390 = vsel %vm389, %v384, %v386
      %v391 = vsel %vm389, %v386, %v388
      %395 = vrot.lane.b32.xlu0 %v371, 126
      %v396 = vpop.permute.xlu0 %395
      %397 = vrot.lane.b32.xlu0 %v372, 126
      %v398 = vpop.permute.xlu0 %397
      %399 = vrot.lane.b32.xlu0 %v373, 126
      %v400 = vpop.permute.xlu0 %399
      %vm401 = vcmask 1031168
      %v402 = vsel %vm401, %v396, %v398
      %v403 = vsel %vm401, %v398, %v400
      %407 = vrot.lane.b32.xlu0 %v371, 110
      %v408 = vpop.permute.xlu0 %407
      %409 = vrot.lane.b32.xlu0 %v372, 110
      %v410 = vpop.permute.xlu0 %409
      %411 = vrot.lane.b32.xlu0 %v373, 110
      %v412 = vpop.permute.xlu0 %411
      %vm413 = vcmask 900096
      %v414 = vsel %vm413, %v408, %v410
      %v415 = vsel %vm413, %v410, %v412
      %419 = vrot.lane.b32.xlu0 %v371, 109
      %v420 = vpop.permute.xlu0 %419
      %421 = vrot.lane.b32.xlu0 %v372, 109
      %v422 = vpop.permute.xlu0 %421
      %423 = vrot.lane.b32.xlu0 %v373, 109
      %v424 = vpop.permute.xlu0 %423
      %vm425 = vcmask 891904
      %v426 = vsel %vm425, %v420, %v422
      %v427 = vsel %vm425, %v422, %v424
      %431 = vrot.lane.b32.xlu0 %v371, 108
      %v432 = vpop.permute.xlu0 %431
      %433 = vrot.lane.b32.xlu0 %v372, 108
      %v434 = vpop.permute.xlu0 %433
      %435 = vrot.lane.b32.xlu0 %v373, 108
      %v436 = vpop.permute.xlu0 %435
      %vm437 = vcmask 883712
      %v438 = vsel %vm437, %v432, %v434
      %v439 = vsel %vm437, %v434, %v436
      %443 = vrot.lane.b32.xlu0 %v371, 92
      %v444 = vpop.permute.xlu0 %443
      %445 = vrot.lane.b32.xlu0 %v372, 92
      %v446 = vpop.permute.xlu0 %445
      %447 = vrot.lane.b32.xlu0 %v373, 92
      %v448 = vpop.permute.xlu0 %447
      %vm449 = vcmask 752640
      %v450 = vsel %vm449, %v444, %v446
      %v451 = vsel %vm449, %v446, %v448
      %455 = vrot.lane.b32.xlu0 %v371, 91
      %v456 = vpop.permute.xlu0 %455
      %457 = vrot.lane.b32.xlu0 %v372, 91
      %v458 = vpop.permute.xlu0 %457
      %459 = vrot.lane.b32.xlu0 %v373, 91
      %v460 = vpop.permute.xlu0 %459
      %vm461 = vcmask 744448
      %v462 = vsel %vm461, %v456, %v458
      %v463 = vsel %vm461, %v458, %v460
      %467 = vrot.lane.b32.xlu0 %v371, 90
      %v468 = vpop.permute.xlu0 %467
      %469 = vrot.lane.b32.xlu0 %v372, 90
      %v470 = vpop.permute.xlu0 %469
      %471 = vrot.lane.b32.xlu0 %v373, 90
      %v472 = vpop.permute.xlu0 %471
      %vm473 = vcmask 736256
      %v474 = vsel %vm473, %v468, %v470
      %v475 = vsel %vm473, %v470, %v472
      %482 = vrot.lane.b32.xlu0 %v374, 127
      %v483 = vpop.permute.xlu0 %482
      %484 = vrot.lane.b32.xlu0 %v375, 127
      %v485 = vpop.permute.xlu0 %484
      %486 = vrot.lane.b32.xlu0 %v376, 127
      %v487 = vpop.permute.xlu0 %486
      %v488 = vsel %vm389, %v483, %v485
      %v489 = vsel %vm389, %v485, %v487
      %493 = vrot.lane.b32.xlu0 %v374, 126
      %v494 = vpop.permute.xlu0 %493
      %495 = vrot.lane.b32.xlu0 %v375, 126
      %v496 = vpop.permute.xlu0 %495
      %497 = vrot.lane.b32.xlu0 %v376, 126
      %v498 = vpop.permute.xlu0 %497
      %v499 = vsel %vm401, %v494, %v496
      %v500 = vsel %vm401, %v496, %v498
      %504 = vrot.lane.b32.xlu0 %v374, 110
      %v505 = vpop.permute.xlu0 %504
      %506 = vrot.lane.b32.xlu0 %v375, 110
      %v507 = vpop.permute.xlu0 %506
      %508 = vrot.lane.b32.xlu0 %v376, 110
      %v509 = vpop.permute.xlu0 %508
      %v510 = vsel %vm413, %v505, %v507
      %v511 = vsel %vm413, %v507, %v509
      %515 = vrot.lane.b32.xlu0 %v374, 109
      %v516 = vpop.permute.xlu0 %515
      %517 = vrot.lane.b32.xlu0 %v375, 109
      %v518 = vpop.permute.xlu0 %517
      %519 = vrot.lane.b32.xlu0 %v376, 109
      %v520 = vpop.permute.xlu0 %519
      %v521 = vsel %vm425, %v516, %v518
      %v522 = vsel %vm425, %v518, %v520
      %526 = vrot.lane.b32.xlu0 %v374, 108
      %v527 = vpop.permute.xlu0 %526
      %528 = vrot.lane.b32.xlu0 %v375, 108
      %v529 = vpop.permute.xlu0 %528
      %530 = vrot.lane.b32.xlu0 %v376, 108
      %v531 = vpop.permute.xlu0 %530
      %v532 = vsel %vm437, %v527, %v529
      %v533 = vsel %vm437, %v529, %v531
      %537 = vrot.lane.b32.xlu0 %v374, 92
      %v538 = vpop.permute.xlu0 %537
      %539 = vrot.lane.b32.xlu0 %v375, 92
      %v540 = vpop.permute.xlu0 %539
      %541 = vrot.lane.b32.xlu0 %v376, 92
      %v542 = vpop.permute.xlu0 %541
      %v543 = vsel %vm449, %v538, %v540
      %v544 = vsel %vm449, %v540, %v542
      %551 = vrot.lane.b32.xlu0 %v377, 37
      %v552 = vpop.permute.xlu0 %551
      %553 = vrot.lane.b32.xlu0 %v378, 37
      %v554 = vpop.permute.xlu0 %553
      %555 = vrot.lane.b32.xlu0 %v379, 37
      %v556 = vpop.permute.xlu0 %555
      %vm557 = vcmask 302080
      %v558 = vsel %vm557, %v552, %v554
      %v559 = vsel %vm557, %v554, %v556
      %560 = vrot.lane.b32.xlu0 %v377, 36
      %v561 = vpop.permute.xlu0 %560
      %562 = vrot.lane.b32.xlu0 %v378, 36
      %v563 = vpop.permute.xlu0 %562
      %564 = vrot.lane.b32.xlu0 %v379, 36
      %v565 = vpop.permute.xlu0 %564
      %vm566 = vcmask 293888
      %v567 = vsel %vm566, %v561, %v563
      %v568 = vsel %vm566, %v563, %v565
      %569 = vrot.lane.b32.xlu0 %v377, 35
      %v570 = vpop.permute.xlu0 %569
      %571 = vrot.lane.b32.xlu0 %v378, 35
      %v572 = vpop.permute.xlu0 %571
      %573 = vrot.lane.b32.xlu0 %v379, 35
      %v574 = vpop.permute.xlu0 %573
      %vm575 = vcmask 285696
      %v576 = vsel %vm575, %v570, %v572
      %v577 = vsel %vm575, %v572, %v574
      %578 = vrot.lane.b32.xlu0 %v377, 19
      %v579 = vpop.permute.xlu0 %578
      %580 = vrot.lane.b32.xlu0 %v378, 19
      %v581 = vpop.permute.xlu0 %580
      %582 = vrot.lane.b32.xlu0 %v379, 19
      %v583 = vpop.permute.xlu0 %582
      %vm584 = vcmask 154624
      %v585 = vsel %vm584, %v579, %v581
      %v586 = vsel %vm584, %v581, %v583
      %587 = vrot.lane.b32.xlu0 %v377, 18
      %v588 = vpop.permute.xlu0 %587
      %589 = vrot.lane.b32.xlu0 %v378, 18
      %v590 = vpop.permute.xlu0 %589
      %591 = vrot.lane.b32.xlu0 %v379, 18
      %v592 = vpop.permute.xlu0 %591
      %vm593 = vcmask 146432
      %v594 = vsel %vm593, %v588, %v590
      %v595 = vsel %vm593, %v590, %v592
      %596 = vrot.lane.b32.xlu0 %v377, 17
      %v597 = vpop.permute.xlu0 %596
      %598 = vrot.lane.b32.xlu0 %v378, 17
      %v599 = vpop.permute.xlu0 %598
      %600 = vrot.lane.b32.xlu0 %v379, 17
      %v601 = vpop.permute.xlu0 %600
      %vm602 = vcmask 138240
      %v603 = vsel %vm602, %v597, %v599
      %v604 = vsel %vm602, %v599, %v601
      %605 = vrot.lane.b32.xlu0 %v377, 1
      %v606 = vpop.permute.xlu0 %605
      %607 = vrot.lane.b32.xlu0 %v378, 1
      %v608 = vpop.permute.xlu0 %607
      %609 = vrot.lane.b32.xlu0 %v379, 1
      %v610 = vpop.permute.xlu0 %609
      %vm611 = vcmask 7168
      %v612 = vsel %vm611, %v606, %v608
      %v613 = vsel %vm611, %v608, %v610
      %614 = vrot.lane.b32.xlu0 %v377, 127
      %v615 = vpop.permute.xlu0 %614
      %616 = vrot.lane.b32.xlu0 %v378, 127
      %v617 = vpop.permute.xlu0 %616
      %618 = vrot.lane.b32.xlu0 %v379, 127
      %v619 = vpop.permute.xlu0 %618
      %v620 = vsel %vm389, %v615, %v617
      %v621 = vsel %vm389, %v617, %v619
      %622 = vrot.lane.b32.xlu0 %v374, 91
      %v623 = vpop.permute.xlu0 %622
      %624 = vrot.lane.b32.xlu0 %v375, 91
      %v625 = vpop.permute.xlu0 %624
      %626 = vrot.lane.b32.xlu0 %v376, 91
      %v627 = vpop.permute.xlu0 %626
      %628 = vrot.lane.b32.xlu0 %v488, 91
      %v629 = vpop.permute.xlu0 %628
      %630 = vrot.lane.b32.xlu0 %v489, 91
      %v631 = vpop.permute.xlu0 %630
      %632 = vrot.lane.b32.xlu0 %v487, 91
      %v633 = vpop.permute.xlu0 %632
      %634 = vrot.lane.b32.xlu0 %v552, 91
      %v635 = vpop.permute.xlu0 %634
      %636 = vrot.lane.b32.xlu0 %v558, 91
      %v637 = vpop.permute.xlu0 %636
      %638 = vrot.lane.b32.xlu0 %v559, 91
      %v639 = vpop.permute.xlu0 %638
      %640 = vrot.lane.b32.xlu0 %v561, 91
      %v641 = vpop.permute.xlu0 %640
      %642 = vrot.lane.b32.xlu0 %v567, 91
      %v643 = vpop.permute.xlu0 %642
      %644 = vrot.lane.b32.xlu0 %v568, 91
      %v645 = vpop.permute.xlu0 %644
      %646 = vrot.lane.b32.xlu0 %v570, 91
      %v647 = vpop.permute.xlu0 %646
      %648 = vrot.lane.b32.xlu0 %v576, 91
      %v649 = vpop.permute.xlu0 %648
      %650 = vrot.lane.b32.xlu0 %v577, 91
      %v651 = vpop.permute.xlu0 %650
      %652 = vrot.lane.b32.xlu0 %v579, 91
      %v653 = vpop.permute.xlu0 %652
      %654 = vrot.lane.b32.xlu0 %v585, 91
      %v655 = vpop.permute.xlu0 %654
      %656 = vrot.lane.b32.xlu0 %v586, 91
      %v657 = vpop.permute.xlu0 %656
      %658 = vrot.lane.b32.xlu0 %v588, 91
      %v659 = vpop.permute.xlu0 %658
      %660 = vrot.lane.b32.xlu0 %v594, 91
      %v661 = vpop.permute.xlu0 %660
      %662 = vrot.lane.b32.xlu0 %v595, 91
      %v663 = vpop.permute.xlu0 %662
      %664 = vrot.lane.b32.xlu0 %v597, 91
      %v665 = vpop.permute.xlu0 %664
      %666 = vrot.lane.b32.xlu0 %v603, 91
      %v667 = vpop.permute.xlu0 %666
      %668 = vrot.lane.b32.xlu0 %v604, 91
      %v669 = vpop.permute.xlu0 %668
      %670 = vrot.lane.b32.xlu0 %v606, 91
      %v671 = vpop.permute.xlu0 %670
      %672 = vrot.lane.b32.xlu0 %v612, 91
      %v673 = vpop.permute.xlu0 %672
      %674 = vrot.lane.b32.xlu0 %v613, 91
      %v675 = vpop.permute.xlu0 %674
      %676 = vrot.lane.b32.xlu0 %v377, 91
      %v677 = vpop.permute.xlu0 %676
      %678 = vrot.lane.b32.xlu0 %v378, 91
      %v679 = vpop.permute.xlu0 %678
      %680 = vrot.lane.b32.xlu0 %v379, 91
      %v681 = vpop.permute.xlu0 %680
      %682 = vrot.lane.b32.xlu0 %v620, 91
      %v683 = vpop.permute.xlu0 %682
      %684 = vrot.lane.b32.xlu0 %v621, 91
      %v685 = vpop.permute.xlu0 %684
      %686 = vrot.lane.b32.xlu0 %v619, 91
      %v687 = vpop.permute.xlu0 %686
      %v688 = vsel %vm461, %v623, %v625
      %v689 = vsel %vm461, %v625, %v627
      %v690 = vsel %vm461, %v629, %v631
      %v691 = vsel %vm461, %v631, %v633
      %v692 = vsel %vm461, %v635, %v637
      %v693 = vsel %vm461, %v637, %v639
      %v694 = vsel %vm461, %v641, %v643
      %v695 = vsel %vm461, %v643, %v645
      %v696 = vsel %vm461, %v647, %v649
      %v697 = vsel %vm461, %v649, %v651
      %v698 = vsel %vm461, %v653, %v655
      %v699 = vsel %vm461, %v655, %v657
      %v700 = vsel %vm461, %v659, %v661
      %v701 = vsel %vm461, %v661, %v663
      %v702 = vsel %vm461, %v665, %v667
      %v703 = vsel %vm461, %v667, %v669
      %v704 = vsel %vm461, %v671, %v673
      %v705 = vsel %vm461, %v673, %v675
      %v706 = vsel %vm461, %v677, %v679
      %v707 = vsel %vm461, %v679, %v681
      %v708 = vsel %vm461, %v683, %v685
      %v709 = vsel %vm461, %v685, %v687
      %v743 = vld [vmem:[%s3] sm:$0xff]
      %v744 = vpack.c.bf16 %v390, %v371
      %v745 = vpack.c.bf16 %v391, %v372
      %v746 = vpack.c.bf16 %v388, %v373
      %v747 = vpack.c.bf16 %v414, %v402
      %v748 = vpack.c.bf16 %v415, %v403
      %v749 = vpack.c.bf16 %v412, %v400
      %v750 = vpack.c.bf16 %v438, %v426
      %v751 = vpack.c.bf16 %v439, %v427
      %v752 = vpack.c.bf16 %v436, %v424
      %v753 = vpack.c.bf16 %v462, %v450
      %v754 = vpack.c.bf16 %v463, %v451
      %v755 = vpack.c.bf16 %v460, %v448
      %v756 = vpack.c.bf16 %v374, %v474
      %v757 = vpack.c.bf16 %v375, %v475
      %v758 = vpack.c.bf16 %v376, %v472
      %v759 = vpack.c.bf16 %v499, %v488
      %v760 = vpack.c.bf16 %v500, %v489
      %v761 = vpack.c.bf16 %v498, %v487
      %v762 = vpack.c.bf16 %v521, %v510
      %v763 = vpack.c.bf16 %v522, %v511
      %v764 = vpack.c.bf16 %v520, %v509
      %v765 = vpack.c.bf16 %v543, %v532
      %v766 = vpack.c.bf16 %v544, %v533
      %v767 = vpack.c.bf16 %v542, %v531
      %v768 = vpack.c.bf16 %v690, %v688
      %v769 = vpack.c.bf16 %v691, %v689
      %v770 = vpack.c.bf16 %v633, %v627
      %v771 = vpack.c.bf16 %v694, %v692
      %v772 = vpack.c.bf16 %v695, %v693
      %v773 = vpack.c.bf16 %v645, %v639
      %v774 = vpack.c.bf16 %v698, %v696
      %v775 = vpack.c.bf16 %v699, %v697
      %v776 = vpack.c.bf16 %v657, %v651
      %v777 = vpack.c.bf16 %v702, %v700
      %v778 = vpack.c.bf16 %v703, %v701
      %v779 = vpack.c.bf16 %v669, %v663
      %v780 = vpack.c.bf16 %v706, %v704
      %v781 = vpack.c.bf16 %v707, %v705
      %v782 = vpack.c.bf16 %v681, %v675
      %v783 = vpack.c.bf16 %v708, %v708
      %v784 = vpack.c.bf16 %v709, %v709
      %v785 = vpack.c.bf16 %v687, %v687
      %v787 = vunpack.c.l.b16 %v743
      %v788 = vunpack.c.h.b16 %v743
      %v789 = vpack.c.b16 %v787, %v787
      %v790 = vpack.c.b16 %v788, %v788
      %vm792 = vcmask 719872
      %v794 = vsel %vm792, %v790, 0
      %vm796 = vcmask 1043456
      %v798 = vsel %vm796, %v783, 0
      %v801 = vsel %vm796, %v784, 0
      %v804 = vsel %vm796, %v785, 0
      %806 = vmatprep.subr.bf16.mxu0 %v745
      %807 = vmatpush1.bf16.msra.mxu0 %v744
      %808 = vmatprep.subr.bf16.mxu0 %v748
      %809 = vmatpush1.bf16.msra.mxu0 %v747
      %810 = vmatprep.subr.bf16.mxu0 %v751
      %811 = vmatpush1.bf16.msra.mxu0 %v750
      %812 = vmatprep.subr.bf16.mxu0 %v754
      %813 = vmatpush1.bf16.msra.mxu0 %v753
      %814 = vmatprep.subr.bf16.mxu0 %v757
      %815 = vmatpush1.bf16.msra.mxu0 %v756
      %816 = vmatprep.subr.bf16.mxu0 %v760
      %817 = vmatpush1.bf16.msra.mxu0 %v759
      %818 = vmatprep.subr.bf16.mxu0 %v763
      %819 = vmatpush1.bf16.msra.mxu0 %v762
      %820 = vmatprep.subr.bf16.mxu0 %v766
      %821 = vmatpush1.bf16.msra.mxu0 %v765
      %822 = vmatprep.subr.bf16.mxu0 %v769
      %823 = vmatpush1.bf16.msra.mxu0 %v768
      %824 = vmatprep.subr.bf16.mxu0 %v772
      %825 = vmatpush1.bf16.msra.mxu0 %v771
      %826 = vmatprep.subr.bf16.mxu0 %v775
      %827 = vmatpush1.bf16.msra.mxu0 %v774
      %828 = vmatprep.subr.bf16.mxu0 %v778
      %829 = vmatpush1.bf16.msra.mxu0 %v777
      %830 = vmatprep.subr.bf16.mxu0 %v781
      %831 = vmatpush1.bf16.msra.mxu0 %v780
      %832 = vmatprep.subr.bf16.mxu0 %v801
      %833 = vmatpush1.bf16.msra.mxu0 %v798
      %834 = vmatprep.subr.bf16.mxu0 0
      %835 = vmatpush1.bf16.msra.mxu0 0
      %836 = vmatprep.subr.bf16.mxu0 0
      %837 = vmatpush1.bf16.msra.mxu0 0
      %838 = vmatprep.mubr.bf16.mxu0 %v794
      %839 = vmatmul.mubr.bf16.gmra.mrb[0].mxu0 %v789
      %v840 = vpop.f32.mrb[0].mxu0
      %v841 = vadd.f32 0.0, %v840
      %v842 = vpop.f32.mrb[0].mxu0
      %v843 = vadd.f32 0.0, %v842
      %v844 = vpop.f32.mrb[0].mxu0
      %v845 = vpop.f32.mrb[0].mxu0
      %846 = vdwg.mxu0
      %847 = vmatprep.subr.bf16.mxu0 0
      %848 = vmatpush1.bf16.msra.mxu0 %v746
      %849 = vmatprep.subr.bf16.mxu0 0
      %850 = vmatpush1.bf16.msra.mxu0 %v749
      %851 = vmatprep.subr.bf16.mxu0 0
      %852 = vmatpush1.bf16.msra.mxu0 %v752
      %853 = vmatprep.subr.bf16.mxu0 0
      %854 = vmatpush1.bf16.msra.mxu0 %v755
      %855 = vmatprep.subr.bf16.mxu0 0
      %856 = vmatpush1.bf16.msra.mxu0 %v758
      %857 = vmatprep.subr.bf16.mxu0 0
      %858 = vmatpush1.bf16.msra.mxu0 %v761
      %859 = vmatprep.subr.bf16.mxu0 0
      %860 = vmatpush1.bf16.msra.mxu0 %v764
      %861 = vmatprep.subr.bf16.mxu0 0
      %862 = vmatpush1.bf16.msra.mxu0 %v767
      %863 = vmatprep.subr.bf16.mxu0 0
      %864 = vmatpush1.bf16.msra.mxu0 %v770
      %865 = vmatprep.subr.bf16.mxu0 0
      %866 = vmatpush1.bf16.msra.mxu0 %v773
      %867 = vmatprep.subr.bf16.mxu0 0
      %868 = vmatpush1.bf16.msra.mxu0 %v776
      %869 = vmatprep.subr.bf16.mxu0 0
      %870 = vmatpush1.bf16.msra.mxu0 %v779
      %871 = vmatprep.subr.bf16.mxu0 0
      %872 = vmatpush1.bf16.msra.mxu0 %v782
      %873 = vmatprep.subr.bf16.mxu0 0
      %874 = vmatpush1.bf16.msra.mxu0 %v804
      %875 = vmatprep.subr.bf16.mxu0 0
      %876 = vmatpush1.bf16.msra.mxu0 0
      %877 = vmatprep.subr.bf16.mxu0 0
      %878 = vmatpush1.bf16.msra.mxu0 0
      %879 = vmatprep.mubr.bf16.mxu0 %v794
      %880 = vmatmul.mubr.bf16.gmra.mrb[0].mxu0 %v789
      %v881 = vpop.f32.mrb[0].mxu0
      %v882 = vadd.f32 0.0, %v881
      %v883 = vpop.f32.mrb[0].mxu0
      %v884 = vpop.f32.mrb[0].mxu0
      %v885 = vpop.f32.mrb[0].mxu0
      %886 = vdwg.mxu0
      %v887 = vld [vmem:[%s4] sm:$0xff]
      %889 = vset.pattern.permute.xlu0 0
      %890 = vperm.xlu0 %889, %v887
      %v891 = vpop.permute.xlu0 %890
      %v893 = vmul.f32 %v841, %v891
      %v894 = vmul.f32 %v843, %v891
      %v895 = vmul.f32 %v882, %v891
      %v896 = vld [vmem:[%s5] sm:$0xff]
      %898 = vset.pattern.permute.xlu0 0
      %899 = vperm.xlu0 %898, %v896
      %v900 = vpop.permute.xlu0 %899
      %v902 = vadd.f32 %v893, %v900
      %v903 = vadd.f32 %v894, %v900
      %v904 = vadd.f32 %v895, %v900
      %vm905 = vcmp.ge.f32.partialorder %v902, 0.0
      %vm906 = vcmp.ge.f32.partialorder %v903, 0.0
      %vm907 = vcmp.ge.f32.partialorder %v904, 0.0
      %v908 = vmul.f32 %v902, 0.01
      %v909 = vmul.f32 %v903, 0.01
      %v910 = vmul.f32 %v904, 0.01
      %v911 = vsel %vm905, %v902, %v908
      %v912 = vsel %vm906, %v903, %v909
      %v913 = vsel %vm907, %v904, %v910
      %914 = vst [vmem:[%s369] sm:$0xff] %v911
      %915 = vst [vmem:[%s369 + $0x8] sm:$0xff] %v912
      %vm916 = vcmask 261120
      %917 = vst.msk [vmem:[%s369 + $0x10] sm:$0xff] %vm916, %v913
      %p918 = scmp.lt.s32.totalorder %s21, 1
      %s919 = scalar_select %p918, %s21, 1
      %p920 = scmp.lt.s32.totalorder %s22, 7
      %s921 = scalar_select %p920, %s22, 7
      %s922 = smul.addr %s921, 3
      %s923 = smul.addr %s919, 24
      %s924 = sadd.s32 %s922, %s923
      %s925 = smul.addr %s924, 8
      %s926 = scalar_lea.vmem %s6, %s925
      // Predicated region
      $region45: #{basic_conv3d.3} parent=43 // pred_check
        %p927 = pneg %p200
      $region46: #{basic_conv3d.3} parent=43 // pred_check_branch
        %929 = sbr.rel (%p927) target = $region48
      $region47: #{basic_conv3d.3} parent=43 // pred_region
        _
      $region48: #{basic_conv3d.3} parent=43 // pred_fallthru
        _
    $region44: #{basic_conv3d.3} parent=5 // pred_fallthru
      _
    %p930 = scmp.le.s32.totalorder 2, %s12
    // Predicated region
    $region49: #{basic_conv3d.3} parent=5 // pred_check
      %p931 = pneg %p930
    $region50: #{basic_conv3d.3} parent=5 // pred_check_branch
      %933 = sbr.rel (%p931) target = $region52
    $region51: #{basic_conv3d.3} parent=5 // pred_region
      %s934 = ssub.s32 %s12, 2
      // Predicated region
      $region53: #{basic_conv3d.3} parent=51 // pred_check
        %p935 = pneg %p206
      $region54: #{basic_conv3d.3} parent=51 // pred_check_branch
        %937 = sbr.rel (%p935) target = $region56
      $region55: #{basic_conv3d.3} parent=51 // pred_region
        %p938 = scmp.lt.s32.totalorder %s23, 1
        %s939 = scalar_select %p938, %s23, 1
        %p940 = scmp.lt.s32.totalorder %s24, 7
        %s941 = scalar_select %p940, %s24, 7
        %s942 = smul.addr %s941, 3
        %s943 = smul.addr %s939, 24
        %s944 = sadd.s32 %s942, %s943
        %s945 = smul.addr %s944, 8
        %s946 = scalar_lea.vmem %s6, %s945
      $region56: #{basic_conv3d.3} parent=51 // pred_fallthru
        _
    $region52: #{basic_conv3d.3} parent=5 // pred_fallthru
      _
  $region6: #{basic_conv3d.3} parent=0 // loop_footer
    %s16 = sadd.s32 1, %s12
  $region7: #{basic_conv3d.3} parent=0 // loop_footer_branch
    %11 = sbr.rel target = $region3
  $region8: #{basic_conv3d.3} parent=0 // loop_exit
    _

// kernel: basic_conv3d.2
$region0: #{basic_conv3d.2}
  #allocation0 [shape = 'u32[]', space=smem, size = 0x4, offset = 0x4, fixed_abs, tag = 'smem constant byte address 0x4 - core index']
  #allocation1 [shape = 'u32[144,128]{1,0:T(1,128)}', space=vmem, size = 0x12000, scoped, tag = 'internal scratch']
  %s0 = inlined_call_operand.vmem [shape: f32[2,10,8,342], index: 0, kind: input, shape index: {}, may-alias: {0,1,2}]
  %s1 = inlined_call_operand.vmem [shape: f32[2,10,8,342], index: 1, kind: input, shape index: {}, may-alias: {0,1,2}]
  %s2 = inlined_call_operand.vmem [shape: f32[2,10,8,342], index: 2, kind: input, shape index: {}, may-alias: {0,1,2}]
  %s3 = inlined_call_operand.vmem [shape: bf16[8,216], index: 3, kind: input, shape index: {}]
  %s4 = inlined_call_operand.vmem [shape: f32[2,8,8,1], index: 4, kind: output, shape index: {0}]
  %s5 = inlined_call_operand.vmem [shape: f32[2,8,8,1], index: 5, kind: output, shape index: {1}]
  %6 = xla_tuple %s4, %s5
  %s7 = sld [smem:[#allocation0]]
  $region57: #{basic_conv3d.2} parent=0
    _
  %s9 = ssub.s32 1, %s7
  %s10 = scalar_select 0, %s9, %s7
  loop: start=0, step=1, limit=18
  $region2: #{basic_conv3d.2} parent=0 // loop_pre_header
    _
  $region3: #{basic_conv3d.2} parent=0 // loop_header
    %s12 = sphi 0, %s16
    %p13 = scmp.ge.s32.totalorder %s12, 18
    %s19 = sphi 0, %s31
    %s20 = sphi 0, %s27
    %s21 = sphi 0, %s19
    %s22 = sphi 0, %s20
    %s23 = sphi 0, %s21
    %s24 = sphi 0, %s22
    %s36 = sphi 0, %s38
    %s39 = sphi 0, %s36
    %s40 = sphi 0, %s39
    %s56 = sphi 0, %s40
    %s66 = sphi 0, %s68
    %s69 = sphi 0, %s66
    %s70 = sphi 0, %s69
    %s86 = sphi 0, %s70
    %s96 = sphi 0, %s98
    %s99 = sphi 0, %s96
    %s100 = sphi 0, %s99
    %s116 = sphi 0, %s100
    %s120 = sphi 0, %s120
    %s122 = sphi 0, %s120
    %s123 = sphi 0, %s122
    %s137 = sphi 0, %s123
    %s145 = sphi 0, %s147
    %s148 = sphi 0, %s145
    %s149 = sphi 0, %s148
    %s165 = sphi 0, %s149
    %s173 = sphi 0, %s175
    %s176 = sphi 0, %s173
    %s177 = sphi 0, %s176
    %s193 = sphi 0, %s177
  $region4: #{basic_conv3d.2} parent=0 // loop_header_branch
    %15 = sbr.rel (%p13) target = $region8
  $region5: #{basic_conv3d.2} parent=0 // loop_body
    %s17 = ssub.s32 %s12, 1
    %s18 = ssub.s32 %s12, 2
    %s25 = sadd.s32 1, %s20
    %p26 = scmp.ge.s32.totalorder %s25, 8
    %s27 = scalar_select %p26, 0, %s25
    %s28 = sadd.s32 1, %s19
    %s29 = scalar_select %p26, %s28, %s19
    %p30 = scmp.ge.s32.totalorder %s29, 2
    %s31 = scalar_select %p30, 0, %s29
    %s32 = ssub.s32 %s19, %s31
    %s33 = ssub.s32 %s20, %s27
    %s34 = sor.u32 %s32, %s33
    %p35 = scmp.eq.s32.totalorder %s34, 0
    %s37 = sadd.s32 %s36, 1
    %s38 = scalar_select %p35, %s36, %s37
    %p41 = pneg %p35
    %p42 = scmp.eq.s32.totalorder %s12, 15
    %p43 = por %p41, %p42
    %p44 = scmp.ne.s32.totalorder %s36, %s39
    %p45 = scmp.eq.s32.totalorder %s12, 0
    %p46 = por %p44, %p45
    %p47 = scmp.ne.s32.totalorder %s36, %s39
    %p48 = scmp.eq.s32.totalorder %s17, 15
    %p49 = por %p47, %p48
    %p50 = scmp.ne.s32.totalorder %s39, %s40
    %p51 = scmp.eq.s32.totalorder %s17, 0
    %p52 = por %p50, %p51
    %p53 = scmp.ne.s32.totalorder %s39, %s40
    %p54 = scmp.eq.s32.totalorder %s18, 15
    %p55 = por %p53, %p54
    %p57 = scmp.ne.s32.totalorder %s40, %s56
    %p58 = scmp.eq.s32.totalorder %s18, 0
    %p59 = por %p57, %p58
    %s60 = sadd.s32 %s20, 1
    %s61 = sadd.s32 %s27, 1
    %s62 = ssub.s32 %s19, %s31
    %s63 = ssub.s32 %s60, %s61
    %s64 = sor.u32 %s62, %s63
    %p65 = scmp.eq.s32.totalorder %s64, 0
    %s67 = sadd.s32 %s66, 1
    %s68 = scalar_select %p65, %s66, %s67
    %p71 = pneg %p65
    %p72 = scmp.eq.s32.totalorder %s12, 15
    %p73 = por %p71, %p72
    %p74 = scmp.ne.s32.totalorder %s66, %s69
    %p75 = scmp.eq.s32.totalorder %s12, 0
    %p76 = por %p74, %p75
    %p77 = scmp.ne.s32.totalorder %s66, %s69
    %p78 = scmp.eq.s32.totalorder %s17, 15
    %p79 = por %p77, %p78
    %p80 = scmp.ne.s32.totalorder %s69, %s70
    %p81 = scmp.eq.s32.totalorder %s17, 0
    %p82 = por %p80, %p81
    %p83 = scmp.ne.s32.totalorder %s69, %s70
    %p84 = scmp.eq.s32.totalorder %s18, 15
    %p85 = por %p83, %p84
    %p87 = scmp.ne.s32.totalorder %s70, %s86
    %p88 = scmp.eq.s32.totalorder %s18, 0
    %p89 = por %p87, %p88
    %s90 = sadd.s32 %s20, 2
    %s91 = sadd.s32 %s27, 2
    %s92 = ssub.s32 %s19, %s31
    %s93 = ssub.s32 %s90, %s91
    %s94 = sor.u32 %s92, %s93
    %p95 = scmp.eq.s32.totalorder %s94, 0
    %s97 = sadd.s32 %s96, 1
    %s98 = scalar_select %p95, %s96, %s97
    %p101 = pneg %p95
    %p102 = scmp.eq.s32.totalorder %s12, 15
    %p103 = por %p101, %p102
    %p104 = scmp.ne.s32.totalorder %s96, %s99
    %p105 = scmp.eq.s32.totalorder %s12, 0
    %p106 = por %p104, %p105
    %p107 = scmp.ne.s32.totalorder %s96, %s99
    %p108 = scmp.eq.s32.totalorder %s17, 15
    %p109 = por %p107, %p108
    %p110 = scmp.ne.s32.totalorder %s99, %s100
    %p111 = scmp.eq.s32.totalorder %s17, 0
    %p112 = por %p110, %p111
    %p113 = scmp.ne.s32.totalorder %s99, %s100
    %p114 = scmp.eq.s32.totalorder %s18, 15
    %p115 = por %p113, %p114
    %p117 = scmp.ne.s32.totalorder %s100, %s116
    %p118 = scmp.eq.s32.totalorder %s18, 0
    %p119 = por %p117, %p118
    %s121 = sadd.s32 %s120, 1
    %p124 = scmp.eq.s32.totalorder %s12, 15
    %p125 = scmp.ne.s32.totalorder %s120, %s122
    %p126 = scmp.eq.s32.totalorder %s12, 0
    %p127 = por %p125, %p126
    %p128 = scmp.ne.s32.totalorder %s120, %s122
    %p129 = scmp.eq.s32.totalorder %s17, 15
    %p130 = por %p128, %p129
    %p131 = scmp.ne.s32.totalorder %s122, %s123
    %p132 = scmp.eq.s32.totalorder %s17, 0
    %p133 = por %p131, %p132
    %p134 = scmp.ne.s32.totalorder %s122, %s123
    %p135 = scmp.eq.s32.totalorder %s18, 15
    %p136 = por %p134, %p135
    %p138 = scmp.ne.s32.totalorder %s123, %s137
    %p139 = scmp.eq.s32.totalorder %s18, 0
    %p140 = por %p138, %p139
    %s141 = ssub.s32 %s19, %s31
    %s142 = ssub.s32 %s20, %s27
    %s143 = sor.u32 %s141, %s142
    %p144 = scmp.eq.s32.totalorder %s143, 0
    %s146 = sadd.s32 %s145, 1
    %s147 = scalar_select %p144, %s145, %s146
    %p150 = pneg %p144
    %p151 = scmp.eq.s32.totalorder %s12, 15
    %p152 = por %p150, %p151
    %p153 = scmp.ne.s32.totalorder %s145, %s148
    %p154 = scmp.eq.s32.totalorder %s12, 0
    %p155 = por %p153, %p154
    %p156 = scmp.ne.s32.totalorder %s145, %s148
    %p157 = scmp.eq.s32.totalorder %s17, 15
    %p158 = por %p156, %p157
    %p159 = scmp.ne.s32.totalorder %s148, %s149
    %p160 = scmp.eq.s32.totalorder %s17, 0
    %p161 = por %p159, %p160
    %p162 = scmp.ne.s32.totalorder %s148, %s149
    %p163 = scmp.eq.s32.totalorder %s18, 15
    %p164 = por %p162, %p163
    %p166 = scmp.ne.s32.totalorder %s149, %s165
    %p167 = scmp.eq.s32.totalorder %s18, 0
    %p168 = por %p166, %p167
    %s169 = ssub.s32 %s19, %s31
    %s170 = ssub.s32 %s20, %s27
    %s171 = sor.u32 %s169, %s170
    %p172 = scmp.eq.s32.totalorder %s171, 0
    %s174 = sadd.s32 %s173, 1
    %s175 = scalar_select %p172, %s173, %s174
    %p178 = pneg %p172
    %p179 = scmp.eq.s32.totalorder %s12, 15
    %p180 = por %p178, %p179
    %p181 = scmp.ne.s32.totalorder %s173, %s176
    %p182 = scmp.eq.s32.totalorder %s12, 0
    %p183 = por %p181, %p182
    %p184 = scmp.ne.s32.totalorder %s173, %s176
    %p185 = scmp.eq.s32.totalorder %s17, 15
    %p186 = por %p184, %p185
    %p187 = scmp.ne.s32.totalorder %s176, %s177
    %p188 = scmp.eq.s32.totalorder %s17, 0
    %p189 = por %p187, %p188
    %p190 = scmp.ne.s32.totalorder %s176, %s177
    %p191 = scmp.eq.s32.totalorder %s18, 15
    %p192 = por %p190, %p191
    %p194 = scmp.ne.s32.totalorder %s177, %s193
    %p195 = scmp.eq.s32.totalorder %s18, 0
    %p196 = por %p194, %p195
    %p197 = scmp.le.s32.totalorder 1, %s12
    %p198 = scmp.lt.s32.totalorder %s12, 17
    %p199 = pnand %p197, %p198
    %p200 = pneg %p199
    // Predicated region
    $region9: #{basic_conv3d.2} parent=5 // pred_check
      _
    $region10: #{basic_conv3d.2} parent=5 // pred_check_branch
      %202 = sbr.rel (%p199) target = $region12
    $region11: #{basic_conv3d.2} parent=5 // pred_region
      %s203 = ssub.s32 %s12, 1
      // Predicated region
      $region13: #{basic_conv3d.2} parent=11 // pred_check
        %p204 = pneg %p133
      $region14: #{basic_conv3d.2} parent=11 // pred_check_branch
        %206 = sbr.rel (%p204) target = $region16
      $region15: #{basic_conv3d.2} parent=11 // pred_region
        _
      $region16: #{basic_conv3d.2} parent=11 // pred_fallthru
        _
    $region12: #{basic_conv3d.2} parent=5 // pred_fallthru
      _
    %p207 = scmp.lt.s32.totalorder %s12, 16
    // Predicated region
    $region17: #{basic_conv3d.2} parent=5 // pred_check
      %p208 = pneg %p207
    $region18: #{basic_conv3d.2} parent=5 // pred_check_branch
      %210 = sbr.rel (%p208) target = $region20
    $region19: #{basic_conv3d.2} parent=5 // pred_region
      // Predicated region
      $region21: #{basic_conv3d.2} parent=19 // pred_check
        %p211 = pneg %p46
      $region22: #{basic_conv3d.2} parent=19 // pred_check_branch
        %213 = sbr.rel (%p211) target = $region24
      $region23: #{basic_conv3d.2} parent=19 // pred_region
        %p214 = scmp.lt.s32.totalorder %s19, 1
        %s215 = scalar_select %p214, %s19, 1
        %p216 = scmp.lt.s32.totalorder %s20, 9
        %s217 = scalar_select %p216, %s20, 9
        %s218 = smul.addr %s217, 3
        %s219 = smul.addr %s215, 30
        %s220 = sadd.s32 %s218, %s219
        %s221 = smul.addr %s220, 8
        %s222 = scalar_lea.vmem %s0, %s221
      $region24: #{basic_conv3d.2} parent=19 // pred_fallthru
        _
      // Predicated region
      $region25: #{basic_conv3d.2} parent=19 // pred_check
        %p223 = pneg %p76
      $region26: #{basic_conv3d.2} parent=19 // pred_check_branch
        %225 = sbr.rel (%p223) target = $region28
      $region27: #{basic_conv3d.2} parent=19 // pred_region
        %s226 = sadd.s32 %s20, 1
        %p227 = scmp.lt.s32.totalorder %s19, 1
        %s228 = scalar_select %p227, %s19, 1
        %p229 = scmp.lt.s32.totalorder %s226, 9
        %s230 = scalar_select %p229, %s226, 9
        %s231 = smul.addr %s230, 3
        %s232 = smul.addr %s228, 30
        %s233 = sadd.s32 %s231, %s232
        %s234 = smul.addr %s233, 8
        %s235 = scalar_lea.vmem %s1, %s234
        %s236 = sadd.s32 %s20, 1
      $region28: #{basic_conv3d.2} parent=19 // pred_fallthru
        _
      // Predicated region
      $region29: #{basic_conv3d.2} parent=19 // pred_check
        %p237 = pneg %p106
      $region30: #{basic_conv3d.2} parent=19 // pred_check_branch
        %239 = sbr.rel (%p237) target = $region32
      $region31: #{basic_conv3d.2} parent=19 // pred_region
        %s240 = sadd.s32 %s20, 2
        %p241 = scmp.lt.s32.totalorder %s19, 1
        %s242 = scalar_select %p241, %s19, 1
        %p243 = scmp.lt.s32.totalorder %s240, 9
        %s244 = scalar_select %p243, %s240, 9
        %s245 = smul.addr %s244, 3
        %s246 = smul.addr %s242, 30
        %s247 = sadd.s32 %s245, %s246
        %s248 = smul.addr %s247, 8
        %s249 = scalar_lea.vmem %s2, %s248
        %s250 = sadd.s32 %s20, 2
      $region32: #{basic_conv3d.2} parent=19 // pred_fallthru
        _
    $region20: #{basic_conv3d.2} parent=5 // pred_fallthru
      _
    %p251 = scmp.le.s32.totalorder 1, %s12
    %p252 = scmp.lt.s32.totalorder %s12, 17
    %p253 = pnand %p251, %p252
    %p254 = pneg %p253
    // Predicated region
    $region33: #{basic_conv3d.2} parent=5 // pred_check
      _
    $region34: #{basic_conv3d.2} parent=5 // pred_check_branch
      %256 = sbr.rel (%p253) target = $region36
    $region35: #{basic_conv3d.2} parent=5 // pred_region
      %s257 = ssub.s32 %s12, 1
      %p258 = scmp.lt.s32.totalorder %s21, 1
      %s259 = scalar_select %p258, %s21, 1
      %p260 = scmp.lt.s32.totalorder %s22, 9
      %s261 = scalar_select %p260, %s22, 9
      %s262 = smul.addr %s261, 3
      %s263 = smul.addr %s259, 30
      %s264 = sadd.s32 %s262, %s263
      %s265 = smul.addr %s264, 8
      %s266 = scalar_lea.vmem %s0, %s265
      %p267 = pneg %p52
      %p268 = pneg %p49
      %s269 = sadd.s32 %s22, 1
      %p270 = scmp.lt.s32.totalorder %s21, 1
      %s271 = scalar_select %p270, %s21, 1
      %p272 = scmp.lt.s32.totalorder %s269, 9
      %s273 = scalar_select %p272, %s269, 9
      %s274 = smul.addr %s273, 3
      %s275 = smul.addr %s271, 30
      %s276 = sadd.s32 %s274, %s275
      %s277 = smul.addr %s276, 8
      %s278 = scalar_lea.vmem %s1, %s277
      %p279 = pneg %p82
      %p280 = pneg %p79
      %s281 = sadd.s32 %s22, 2
      %p282 = scmp.lt.s32.totalorder %s21, 1
      %s283 = scalar_select %p282, %s21, 1
      %p284 = scmp.lt.s32.totalorder %s281, 9
      %s285 = scalar_select %p284, %s281, 9
      %s286 = smul.addr %s285, 3
      %s287 = smul.addr %s283, 30
      %s288 = sadd.s32 %s286, %s287
      %s289 = smul.addr %s288, 8
      %s290 = scalar_lea.vmem %s2, %s289
      %p291 = pneg %p112
      %p292 = pneg %p109
      %p293 = pneg %p133
      %p294 = pneg %p130
      %p295 = pneg %p161
      %p296 = pneg %p158
      %p297 = scmp.lt.s32.totalorder %s21, 1
      %s298 = scalar_select %p297, %s21, 1
      %p299 = scmp.lt.s32.totalorder %s22, 7
      %s300 = scalar_select %p299, %s22, 7
      %s301 = smul.addr %s298, 8
      %s302 = sadd.s32 %s300, %s301
      %s303 = smul.addr %s302, 8
      %s304 = scalar_lea.vmem %s4, %s303
      %p305 = pneg %p189
      %p306 = pneg %p186
      %p307 = scmp.lt.s32.totalorder %s21, 1
      %s308 = scalar_select %p307, %s21, 1
      %p309 = scmp.lt.s32.totalorder %s22, 7
      %s310 = scalar_select %p309, %s22, 7
      %s311 = smul.addr %s308, 8
      %s312 = sadd.s32 %s310, %s311
      %s313 = smul.addr %s312, 8
      %s314 = scalar_lea.vmem %s5, %s313
      %p315 = scmp.lt.s32.totalorder %s21, 1
      %s316 = scalar_select %p315, %s21, 1
      %p317 = scmp.lt.s32.totalorder %s22, 9
      %s318 = scalar_select %p317, %s22, 9
      %s319 = smul.addr %s318, 3
      %s320 = smul.addr %s316, 30
      %s321 = sadd.s32 %s319, %s320
      %s322 = smul.addr %s321, 8
      %s323 = scalar_lea.vmem %s0, %s322
      %s324 = sadd.s32 %s22, 1
      %p325 = scmp.lt.s32.totalorder %s21, 1
      %s326 = scalar_select %p325, %s21, 1
      %p327 = scmp.lt.s32.totalorder %s324, 9
      %s328 = scalar_select %p327, %s324, 9
      %s329 = smul.addr %s328, 3
      %s330 = smul.addr %s326, 30
      %s331 = sadd.s32 %s329, %s330
      %s332 = smul.addr %s331, 8
      %s333 = scalar_lea.vmem %s1, %s332
      %s334 = sadd.s32 %s22, 1
      %s335 = sadd.s32 %s22, 2
      %p336 = scmp.lt.s32.totalorder %s21, 1
      %s337 = scalar_select %p336, %s21, 1
      %p338 = scmp.lt.s32.totalorder %s335, 9
      %s339 = scalar_select %p338, %s335, 9
      %s340 = smul.addr %s339, 3
      %s341 = smul.addr %s337, 30
      %s342 = sadd.s32 %s340, %s341
      %s343 = smul.addr %s342, 8
      %s344 = scalar_lea.vmem %s2, %s343
      %s345 = sadd.s32 %s22, 2
      %p346 = scmp.lt.s32.totalorder %s21, 1
      %s347 = scalar_select %p346, %s21, 1
      %p348 = scmp.lt.s32.totalorder %s22, 7
      %s349 = scalar_select %p348, %s22, 7
      %s350 = smul.addr %s347, 8
      %s351 = sadd.s32 %s349, %s350
      %s352 = smul.addr %s351, 8
      %s353 = scalar_lea.vmem %s4, %s352
      %p354 = scmp.lt.s32.totalorder %s21, 1
      %s355 = scalar_select %p354, %s21, 1
      %p356 = scmp.lt.s32.totalorder %s22, 7
      %s357 = scalar_select %p356, %s22, 7
      %s358 = smul.addr %s355, 8
      %s359 = sadd.s32 %s357, %s358
      %s360 = smul.addr %s359, 8
      %s361 = scalar_lea.vmem %s5, %s360
      %v363 = vld [vmem:[%s323] sm:$0xff]
      %v364 = vld [vmem:[%s323 + $0x8] sm:$0xff]
      %v365 = vld [vmem:[%s323 + $0x10] sm:$0xff]
      %v366 = vld [vmem:[%s333] sm:$0xff]
      %v367 = vld [vmem:[%s333 + $0x8] sm:$0xff]
      %v368 = vld [vmem:[%s333 + $0x10] sm:$0xff]
      %v369 = vld [vmem:[%s344] sm:$0xff]
      %v370 = vld [vmem:[%s344 + $0x8] sm:$0xff]
      %v371 = vld [vmem:[%s344 + $0x10] sm:$0xff]
      %375 = vrot.lane.b32.xlu0 %v363, 127
      %v376 = vpop.permute.xlu0 %375
      %377 = vrot.lane.b32.xlu0 %v364, 127
      %v378 = vpop.permute.xlu0 %377
      %379 = vrot.lane.b32.xlu0 %v365, 127
      %v380 = vpop.permute.xlu0 %379
      %vm381 = vcmask 1039360
      %v382 = vsel %vm381, %v376, %v378
      %v383 = vsel %vm381, %v378, %v380
      %387 = vrot.lane.b32.xlu0 %v363, 126
      %v388 = vpop.permute.xlu0 %387
      %389 = vrot.lane.b32.xlu0 %v364, 126
      %v390 = vpop.permute.xlu0 %389
      %391 = vrot.lane.b32.xlu0 %v365, 126
      %v392 = vpop.permute.xlu0 %391
      %vm393 = vcmask 1031168
      %v394 = vsel %vm393, %v388, %v390
      %v395 = vsel %vm393, %v390, %v392
      %399 = vrot.lane.b32.xlu0 %v363, 110
      %v400 = vpop.permute.xlu0 %399
      %401 = vrot.lane.b32.xlu0 %v364, 110
      %v402 = vpop.permute.xlu0 %401
      %403 = vrot.lane.b32.xlu0 %v365, 110
      %v404 = vpop.permute.xlu0 %403
      %vm405 = vcmask 900096
      %v406 = vsel %vm405, %v400, %v402
      %v407 = vsel %vm405, %v402, %v404
      %411 = vrot.lane.b32.xlu0 %v363, 109
      %v412 = vpop.permute.xlu0 %411
      %413 = vrot.lane.b32.xlu0 %v364, 109
      %v414 = vpop.permute.xlu0 %413
      %415 = vrot.lane.b32.xlu0 %v365, 109
      %v416 = vpop.permute.xlu0 %415
      %vm417 = vcmask 891904
      %v418 = vsel %vm417, %v412, %v414
      %v419 = vsel %vm417, %v414, %v416
      %423 = vrot.lane.b32.xlu0 %v363, 108
      %v424 = vpop.permute.xlu0 %423
      %425 = vrot.lane.b32.xlu0 %v364, 108
      %v426 = vpop.permute.xlu0 %425
      %427 = vrot.lane.b32.xlu0 %v365, 108
      %v428 = vpop.permute.xlu0 %427
      %vm429 = vcmask 883712
      %v430 = vsel %vm429, %v424, %v426
      %v431 = vsel %vm429, %v426, %v428
      %435 = vrot.lane.b32.xlu0 %v363, 92
      %v436 = vpop.permute.xlu0 %435
      %437 = vrot.lane.b32.xlu0 %v364, 92
      %v438 = vpop.permute.xlu0 %437
      %439 = vrot.lane.b32.xlu0 %v365, 92
      %v440 = vpop.permute.xlu0 %439
      %vm441 = vcmask 752640
      %v442 = vsel %vm441, %v436, %v438
      %v443 = vsel %vm441, %v438, %v440
      %447 = vrot.lane.b32.xlu0 %v363, 91
      %v448 = vpop.permute.xlu0 %447
      %449 = vrot.lane.b32.xlu0 %v364, 91
      %v450 = vpop.permute.xlu0 %449
      %451 = vrot.lane.b32.xlu0 %v365, 91
      %v452 = vpop.permute.xlu0 %451
      %vm453 = vcmask 744448
      %v454 = vsel %vm453, %v448, %v450
      %v455 = vsel %vm453, %v450, %v452
      %459 = vrot.lane.b32.xlu0 %v363, 90
      %v460 = vpop.permute.xlu0 %459
      %461 = vrot.lane.b32.xlu0 %v364, 90
      %v462 = vpop.permute.xlu0 %461
      %463 = vrot.lane.b32.xlu0 %v365, 90
      %v464 = vpop.permute.xlu0 %463
      %vm465 = vcmask 736256
      %v466 = vsel %vm465, %v460, %v462
      %v467 = vsel %vm465, %v462, %v464
      %474 = vrot.lane.b32.xlu0 %v366, 127
      %v475 = vpop.permute.xlu0 %474
      %476 = vrot.lane.b32.xlu0 %v367, 127
      %v477 = vpop.permute.xlu0 %476
      %478 = vrot.lane.b32.xlu0 %v368, 127
      %v479 = vpop.permute.xlu0 %478
      %v480 = vsel %vm381, %v475, %v477
      %v481 = vsel %vm381, %v477, %v479
      %485 = vrot.lane.b32.xlu0 %v366, 126
      %v486 = vpop.permute.xlu0 %485
      %487 = vrot.lane.b32.xlu0 %v367, 126
      %v488 = vpop.permute.xlu0 %487
      %489 = vrot.lane.b32.xlu0 %v368, 126
      %v490 = vpop.permute.xlu0 %489
      %v491 = vsel %vm393, %v486, %v488
      %v492 = vsel %vm393, %v488, %v490
      %496 = vrot.lane.b32.xlu0 %v366, 110
      %v497 = vpop.permute.xlu0 %496
      %498 = vrot.lane.b32.xlu0 %v367, 110
      %v499 = vpop.permute.xlu0 %498
      %500 = vrot.lane.b32.xlu0 %v368, 110
      %v501 = vpop.permute.xlu0 %500
      %v502 = vsel %vm405, %v497, %v499
      %v503 = vsel %vm405, %v499, %v501
      %507 = vrot.lane.b32.xlu0 %v366, 109
      %v508 = vpop.permute.xlu0 %507
      %509 = vrot.lane.b32.xlu0 %v367, 109
      %v510 = vpop.permute.xlu0 %509
      %511 = vrot.lane.b32.xlu0 %v368, 109
      %v512 = vpop.permute.xlu0 %511
      %v513 = vsel %vm417, %v508, %v510
      %v514 = vsel %vm417, %v510, %v512
      %518 = vrot.lane.b32.xlu0 %v366, 108
      %v519 = vpop.permute.xlu0 %518
      %520 = vrot.lane.b32.xlu0 %v367, 108
      %v521 = vpop.permute.xlu0 %520
      %522 = vrot.lane.b32.xlu0 %v368, 108
      %v523 = vpop.permute.xlu0 %522
      %v524 = vsel %vm429, %v519, %v521
      %v525 = vsel %vm429, %v521, %v523
      %529 = vrot.lane.b32.xlu0 %v366, 92
      %v530 = vpop.permute.xlu0 %529
      %531 = vrot.lane.b32.xlu0 %v367, 92
      %v532 = vpop.permute.xlu0 %531
      %533 = vrot.lane.b32.xlu0 %v368, 92
      %v534 = vpop.permute.xlu0 %533
      %v535 = vsel %vm441, %v530, %v532
      %v536 = vsel %vm441, %v532, %v534
      %543 = vrot.lane.b32.xlu0 %v369, 37
      %v544 = vpop.permute.xlu0 %543
      %545 = vrot.lane.b32.xlu0 %v370, 37
      %v546 = vpop.permute.xlu0 %545
      %547 = vrot.lane.b32.xlu0 %v371, 37
      %v548 = vpop.permute.xlu0 %547
      %vm549 = vcmask 302080
      %v550 = vsel %vm549, %v544, %v546
      %v551 = vsel %vm549, %v546, %v548
      %552 = vrot.lane.b32.xlu0 %v369, 36
      %v553 = vpop.permute.xlu0 %552
      %554 = vrot.lane.b32.xlu0 %v370, 36
      %v555 = vpop.permute.xlu0 %554
      %556 = vrot.lane.b32.xlu0 %v371, 36
      %v557 = vpop.permute.xlu0 %556
      %vm558 = vcmask 293888
      %v559 = vsel %vm558, %v553, %v555
      %v560 = vsel %vm558, %v555, %v557
      %561 = vrot.lane.b32.xlu0 %v369, 35
      %v562 = vpop.permute.xlu0 %561
      %563 = vrot.lane.b32.xlu0 %v370, 35
      %v564 = vpop.permute.xlu0 %563
      %565 = vrot.lane.b32.xlu0 %v371, 35
      %v566 = vpop.permute.xlu0 %565
      %vm567 = vcmask 285696
      %v568 = vsel %vm567, %v562, %v564
      %v569 = vsel %vm567, %v564, %v566
      %570 = vrot.lane.b32.xlu0 %v369, 19
      %v571 = vpop.permute.xlu0 %570
      %572 = vrot.lane.b32.xlu0 %v370, 19
      %v573 = vpop.permute.xlu0 %572
      %574 = vrot.lane.b32.xlu0 %v371, 19
      %v575 = vpop.permute.xlu0 %574
      %vm576 = vcmask 154624
      %v577 = vsel %vm576, %v571, %v573
      %v578 = vsel %vm576, %v573, %v575
      %579 = vrot.lane.b32.xlu0 %v369, 18
      %v580 = vpop.permute.xlu0 %579
      %581 = vrot.lane.b32.xlu0 %v370, 18
      %v582 = vpop.permute.xlu0 %581
      %583 = vrot.lane.b32.xlu0 %v371, 18
      %v584 = vpop.permute.xlu0 %583
      %vm585 = vcmask 146432
      %v586 = vsel %vm585, %v580, %v582
      %v587 = vsel %vm585, %v582, %v584
      %588 = vrot.lane.b32.xlu0 %v369, 17
      %v589 = vpop.permute.xlu0 %588
      %590 = vrot.lane.b32.xlu0 %v370, 17
      %v591 = vpop.permute.xlu0 %590
      %592 = vrot.lane.b32.xlu0 %v371, 17
      %v593 = vpop.permute.xlu0 %592
      %vm594 = vcmask 138240
      %v595 = vsel %vm594, %v589, %v591
      %v596 = vsel %vm594, %v591, %v593
      %597 = vrot.lane.b32.xlu0 %v369, 1
      %v598 = vpop.permute.xlu0 %597
      %599 = vrot.lane.b32.xlu0 %v370, 1
      %v600 = vpop.permute.xlu0 %599
      %601 = vrot.lane.b32.xlu0 %v371, 1
      %v602 = vpop.permute.xlu0 %601
      %vm603 = vcmask 7168
      %v604 = vsel %vm603, %v598, %v600
      %v605 = vsel %vm603, %v600, %v602
      %606 = vrot.lane.b32.xlu0 %v369, 127
      %v607 = vpop.permute.xlu0 %606
      %608 = vrot.lane.b32.xlu0 %v370, 127
      %v609 = vpop.permute.xlu0 %608
      %610 = vrot.lane.b32.xlu0 %v371, 127
      %v611 = vpop.permute.xlu0 %610
      %v612 = vsel %vm381, %v607, %v609
      %v613 = vsel %vm381, %v609, %v611
      %614 = vrot.lane.b32.xlu0 %v366, 91
      %v615 = vpop.permute.xlu0 %614
      %616 = vrot.lane.b32.xlu0 %v367, 91
      %v617 = vpop.permute.xlu0 %616
      %618 = vrot.lane.b32.xlu0 %v368, 91
      %v619 = vpop.permute.xlu0 %618
      %620 = vrot.lane.b32.xlu0 %v480, 91
      %v621 = vpop.permute.xlu0 %620
      %622 = vrot.lane.b32.xlu0 %v481, 91
      %v623 = vpop.permute.xlu0 %622
      %624 = vrot.lane.b32.xlu0 %v479, 91
      %v625 = vpop.permute.xlu0 %624
      %626 = vrot.lane.b32.xlu0 %v544, 91
      %v627 = vpop.permute.xlu0 %626
      %628 = vrot.lane.b32.xlu0 %v550, 91
      %v629 = vpop.permute.xlu0 %628
      %630 = vrot.lane.b32.xlu0 %v551, 91
      %v631 = vpop.permute.xlu0 %630
      %632 = vrot.lane.b32.xlu0 %v553, 91
      %v633 = vpop.permute.xlu0 %632
      %634 = vrot.lane.b32.xlu0 %v559, 91
      %v635 = vpop.permute.xlu0 %634
      %636 = vrot.lane.b32.xlu0 %v560, 91
      %v637 = vpop.permute.xlu0 %636
      %638 = vrot.lane.b32.xlu0 %v562, 91
      %v639 = vpop.permute.xlu0 %638
      %640 = vrot.lane.b32.xlu0 %v568, 91
      %v641 = vpop.permute.xlu0 %640
      %642 = vrot.lane.b32.xlu0 %v569, 91
      %v643 = vpop.permute.xlu0 %642
      %644 = vrot.lane.b32.xlu0 %v571, 91
      %v645 = vpop.permute.xlu0 %644
      %646 = vrot.lane.b32.xlu0 %v577, 91
      %v647 = vpop.permute.xlu0 %646
      %648 = vrot.lane.b32.xlu0 %v578, 91
      %v649 = vpop.permute.xlu0 %648
      %650 = vrot.lane.b32.xlu0 %v580, 91
      %v651 = vpop.permute.xlu0 %650
      %652 = vrot.lane.b32.xlu0 %v586, 91
      %v653 = vpop.permute.xlu0 %652
      %654 = vrot.lane.b32.xlu0 %v587, 91
      %v655 = vpop.permute.xlu0 %654
      %656 = vrot.lane.b32.xlu0 %v589, 91
      %v657 = vpop.permute.xlu0 %656
      %658 = vrot.lane.b32.xlu0 %v595, 91
      %v659 = vpop.permute.xlu0 %658
      %660 = vrot.lane.b32.xlu0 %v596, 91
      %v661 = vpop.permute.xlu0 %660
      %662 = vrot.lane.b32.xlu0 %v598, 91
      %v663 = vpop.permute.xlu0 %662
      %664 = vrot.lane.b32.xlu0 %v604, 91
      %v665 = vpop.permute.xlu0 %664
      %666 = vrot.lane.b32.xlu0 %v605, 91
      %v667 = vpop.permute.xlu0 %666
      %668 = vrot.lane.b32.xlu0 %v369, 91
      %v669 = vpop.permute.xlu0 %668
      %670 = vrot.lane.b32.xlu0 %v370, 91
      %v671 = vpop.permute.xlu0 %670
      %672 = vrot.lane.b32.xlu0 %v371, 91
      %v673 = vpop.permute.xlu0 %672
      %674 = vrot.lane.b32.xlu0 %v612, 91
      %v675 = vpop.permute.xlu0 %674
      %676 = vrot.lane.b32.xlu0 %v613, 91
      %v677 = vpop.permute.xlu0 %676
      %678 = vrot.lane.b32.xlu0 %v611, 91
      %v679 = vpop.permute.xlu0 %678
      %v680 = vsel %vm453, %v615, %v617
      %v681 = vsel %vm453, %v617, %v619
      %v682 = vsel %vm453, %v621, %v623
      %v683 = vsel %vm453, %v623, %v625
      %v684 = vsel %vm453, %v627, %v629
      %v685 = vsel %vm453, %v629, %v631
      %v686 = vsel %vm453, %v633, %v635
      %v687 = vsel %vm453, %v635, %v637
      %v688 = vsel %vm453, %v639, %v641
      %v689 = vsel %vm453, %v641, %v643
      %v690 = vsel %vm453, %v645, %v647
      %v691 = vsel %vm453, %v647, %v649
      %v692 = vsel %vm453, %v651, %v653
      %v693 = vsel %vm453, %v653, %v655
      %v694 = vsel %vm453, %v657, %v659
      %v695 = vsel %vm453, %v659, %v661
      %v696 = vsel %vm453, %v663, %v665
      %v697 = vsel %vm453, %v665, %v667
      %v698 = vsel %vm453, %v669, %v671
      %v699 = vsel %vm453, %v671, %v673
      %v700 = vsel %vm453, %v675, %v677
      %v701 = vsel %vm453, %v677, %v679
      %v735 = vld [vmem:[%s3] sm:$0xff]
      %v736 = vpack.c.bf16 %v382, %v363
      %v737 = vpack.c.bf16 %v383, %v364
      %v738 = vpack.c.bf16 %v380, %v365
      %v739 = vpack.c.bf16 %v406, %v394
      %v740 = vpack.c.bf16 %v407, %v395
      %v741 = vpack.c.bf16 %v404, %v392
      %v742 = vpack.c.bf16 %v430, %v418
      %v743 = vpack.c.bf16 %v431, %v419
      %v744 = vpack.c.bf16 %v428, %v416
      %v745 = vpack.c.bf16 %v454, %v442
      %v746 = vpack.c.bf16 %v455, %v443
      %v747 = vpack.c.bf16 %v452, %v440
      %v748 = vpack.c.bf16 %v366, %v466
      %v749 = vpack.c.bf16 %v367, %v467
      %v750 = vpack.c.bf16 %v368, %v464
      %v751 = vpack.c.bf16 %v491, %v480
      %v752 = vpack.c.bf16 %v492, %v481
      %v753 = vpack.c.bf16 %v490, %v479
      %v754 = vpack.c.bf16 %v513, %v502
      %v755 = vpack.c.bf16 %v514, %v503
      %v756 = vpack.c.bf16 %v512, %v501
      %v757 = vpack.c.bf16 %v535, %v524
      %v758 = vpack.c.bf16 %v536, %v525
      %v759 = vpack.c.bf16 %v534, %v523
      %v760 = vpack.c.bf16 %v682, %v680
      %v761 = vpack.c.bf16 %v683, %v681
      %v762 = vpack.c.bf16 %v625, %v619
      %v763 = vpack.c.bf16 %v686, %v684
      %v764 = vpack.c.bf16 %v687, %v685
      %v765 = vpack.c.bf16 %v637, %v631
      %v766 = vpack.c.bf16 %v690, %v688
      %v767 = vpack.c.bf16 %v691, %v689
      %v768 = vpack.c.bf16 %v649, %v643
      %v769 = vpack.c.bf16 %v694, %v692
      %v770 = vpack.c.bf16 %v695, %v693
      %v771 = vpack.c.bf16 %v661, %v655
      %v772 = vpack.c.bf16 %v698, %v696
      %v773 = vpack.c.bf16 %v699, %v697
      %v774 = vpack.c.bf16 %v673, %v667
      %v775 = vpack.c.bf16 %v700, %v700
      %v776 = vpack.c.bf16 %v701, %v701
      %v777 = vpack.c.bf16 %v679, %v679
      %v779 = vunpack.c.l.b16 %v735
      %v780 = vunpack.c.h.b16 %v735
      %v781 = vpack.c.b16 %v779, %v779
      %v782 = vpack.c.b16 %v780, %v780
      %vm784 = vcmask 719872
      %v786 = vsel %vm784, %v782, 0
      %vm788 = vcmask 1043456
      %v790 = vsel %vm788, %v775, 0
      %v793 = vsel %vm788, %v776, 0
      %v796 = vsel %vm788, %v777, 0
      %798 = vmatprep.subr.bf16.mxu0 %v737
      %799 = vmatpush1.bf16.msra.mxu0 %v736
      %800 = vmatprep.subr.bf16.mxu0 %v740
      %801 = vmatpush1.bf16.msra.mxu0 %v739
      %802 = vmatprep.subr.bf16.mxu0 %v743
      %803 = vmatpush1.bf16.msra.mxu0 %v742
      %804 = vmatprep.subr.bf16.mxu0 %v746
      %805 = vmatpush1.bf16.msra.mxu0 %v745
      %806 = vmatprep.subr.bf16.mxu0 %v749
      %807 = vmatpush1.bf16.msra.mxu0 %v748
      %808 = vmatprep.subr.bf16.mxu0 %v752
      %809 = vmatpush1.bf16.msra.mxu0 %v751
      %810 = vmatprep.subr.bf16.mxu0 %v755
      %811 = vmatpush1.bf16.msra.mxu0 %v754
      %812 = vmatprep.subr.bf16.mxu0 %v758
      %813 = vmatpush1.bf16.msra.mxu0 %v757
      %814 = vmatprep.subr.bf16.mxu0 %v761
      %815 = vmatpush1.bf16.msra.mxu0 %v760
      %816 = vmatprep.subr.bf16.mxu0 %v764
      %817 = vmatpush1.bf16.msra.mxu0 %v763
      %818 = vmatprep.subr.bf16.mxu0 %v767
      %819 = vmatpush1.bf16.msra.mxu0 %v766
      %820 = vmatprep.subr.bf16.mxu0 %v770
      %821 = vmatpush1.bf16.msra.mxu0 %v769
      %822 = vmatprep.subr.bf16.mxu0 %v773
      %823 = vmatpush1.bf16.msra.mxu0 %v772
      %824 = vmatprep.subr.bf16.mxu0 %v793
      %825 = vmatpush1.bf16.msra.mxu0 %v790
      %826 = vmatprep.subr.bf16.mxu0 0
      %827 = vmatpush1.bf16.msra.mxu0 0
      %828 = vmatprep.subr.bf16.mxu0 0
      %829 = vmatpush1.bf16.msra.mxu0 0
      %830 = vmatprep.mubr.bf16.mxu0 %v786
      %831 = vmatmul.mubr.bf16.gmra.mrb[0].mxu0 %v781
      %v832 = vpop.f32.mrb[0].mxu0
      %v833 = vadd.f32 0.0, %v832
      %v834 = vpop.f32.mrb[0].mxu0
      %v835 = vadd.f32 0.0, %v834
      %v836 = vpop.f32.mrb[0].mxu0
      %v837 = vpop.f32.mrb[0].mxu0
      %838 = vdwg.mxu0
      %839 = vmatprep.subr.bf16.mxu0 0
      %840 = vmatpush1.bf16.msra.mxu0 %v738
      %841 = vmatprep.subr.bf16.mxu0 0
      %842 = vmatpush1.bf16.msra.mxu0 %v741
      %843 = vmatprep.subr.bf16.mxu0 0
      %844 = vmatpush1.bf16.msra.mxu0 %v744
      %845 = vmatprep.subr.bf16.mxu0 0
      %846 = vmatpush1.bf16.msra.mxu0 %v747
      %847 = vmatprep.subr.bf16.mxu0 0
      %848 = vmatpush1.bf16.msra.mxu0 %v750
      %849 = vmatprep.subr.bf16.mxu0 0
      %850 = vmatpush1.bf16.msra.mxu0 %v753
      %851 = vmatprep.subr.bf16.mxu0 0
      %852 = vmatpush1.bf16.msra.mxu0 %v756
      %853 = vmatprep.subr.bf16.mxu0 0
      %854 = vmatpush1.bf16.msra.mxu0 %v759
      %855 = vmatprep.subr.bf16.mxu0 0
      %856 = vmatpush1.bf16.msra.mxu0 %v762
      %857 = vmatprep.subr.bf16.mxu0 0
      %858 = vmatpush1.bf16.msra.mxu0 %v765
      %859 = vmatprep.subr.bf16.mxu0 0
      %860 = vmatpush1.bf16.msra.mxu0 %v768
      %861 = vmatprep.subr.bf16.mxu0 0
      %862 = vmatpush1.bf16.msra.mxu0 %v771
      %863 = vmatprep.subr.bf16.mxu0 0
      %864 = vmatpush1.bf16.msra.mxu0 %v774
      %865 = vmatprep.subr.bf16.mxu0 0
      %866 = vmatpush1.bf16.msra.mxu0 %v796
      %867 = vmatprep.subr.bf16.mxu0 0
      %868 = vmatpush1.bf16.msra.mxu0 0
      %869 = vmatprep.subr.bf16.mxu0 0
      %870 = vmatpush1.bf16.msra.mxu0 0
      %871 = vmatprep.mubr.bf16.mxu0 %v786
      %872 = vmatmul.mubr.bf16.gmra.mrb[0].mxu0 %v781
      %v873 = vpop.f32.mrb[0].mxu0
      %v874 = vadd.f32 0.0, %v873
      %v875 = vpop.f32.mrb[0].mxu0
      %v876 = vpop.f32.mrb[0].mxu0
      %v877 = vpop.f32.mrb[0].mxu0
      %878 = vdwg.mxu0
      %v879 = vlaneseq
      %v880 = vand.u32 %v879, 127
      %v881 = vadd.s32 %v880, 128
      %v882 = vadd.s32 %v880, 256
      %vm883 = vcmp.lt.s32.totalorder %v880, 0
      %v884 = vsub.s32 0, %v880
      %v885 = vsel %vm883, %v884, %v880
      %v886 = vmul.u32.u64.compose %v885, 3817748708
      %v887 = vextract.low.u32 %v886
      %v888 = vextract.high.u32 %v886
      %v889 = vshrl.u32 %v888, 4
      %v890 = vmul.u32 %v889, 18
      %v891 = vsub.s32 %v885, %v890
      %v892 = vsub.s32 0, %v891
      %v893 = vsel %vm883, %v892, %v891
      %vm894 = vcmp.lt.s32.totalorder %v881, 0
      %v895 = vsub.s32 0, %v881
      %v896 = vsel %vm894, %v895, %v881
      %v897 = vmul.u32.u64.compose %v896, 3817748708
      %v898 = vextract.low.u32 %v897
      %v899 = vextract.high.u32 %v897
      %v900 = vshrl.u32 %v899, 4
      %v901 = vmul.u32 %v900, 18
      %v902 = vsub.s32 %v896, %v901
      %v903 = vsub.s32 0, %v902
      %v904 = vsel %vm894, %v903, %v902
      %vm905 = vcmp.lt.s32.totalorder %v882, 0
      %v906 = vsub.s32 0, %v882
      %v907 = vsel %vm905, %v906, %v882
      %v908 = vmul.u32.u64.compose %v907, 3817748708
      %v909 = vextract.low.u32 %v908
      %v910 = vextract.high.u32 %v908
      %v911 = vshrl.u32 %v910, 4
      %v912 = vmul.u32 %v911, 18
      %v913 = vsub.s32 %v907, %v912
      %v914 = vsub.s32 0, %v913
      %v915 = vsel %vm905, %v914, %v913
      %vm916 = vcmp.ne.s32.totalorder %v893, 0
      %vm917 = vcmp.ne.s32.totalorder %v904, 0
      %vm918 = vcmp.ne.s32.totalorder %v915, 0
      %vm919 = vcmp.lt.s32.totalorder %v893, 0
      %vm920 = vcmp.lt.s32.totalorder %v904, 0
      %vm921 = vcmp.lt.s32.totalorder %v915, 0
      %vm922 = vmand %vm919, %vm916
      %vm923 = vmand %vm920, %vm917
      %vm924 = vmand %vm921, %vm918
      %v925 = vadd.s32 %v893, 18
      %v926 = vadd.s32 %v904, 18
      %v927 = vadd.s32 %v915, 18
      %v928 = vsel %vm922, %v925, %v893
      %v929 = vsel %vm923, %v926, %v904
      %v930 = vsel %vm924, %v927, %v915
      %vm931 = vcmp.lt.s32.totalorder %v928, 16
      %vm932 = vcmp.lt.s32.totalorder %v929, 16
      %vm933 = vcmp.lt.s32.totalorder %v930, 16
      %v934 = vsel %vm931, 1, 0
      %v935 = vsel %vm932, 1, 0
      %v936 = vsel %vm933, 1, 0
      %v937 = vcvt.s32.f32 %v934
      %v938 = vcvt.s32.f32 %v935
      %v939 = vcvt.s32.f32 %v936
      %v940 = vmul.f32 %v833, %v937
      %v941 = vmul.f32 %v835, %v938
      %v942 = vmul.f32 %v874, %v939
      %v943 = vadd.f32 %v940, %v941
      %vm944 = vcmask 261120
      %v945 = vsel %vm944, %v942, 0.0
      %v946 = vadd.f32 %v943, %v945
      %947 = vadd.xlane.f32.xlu0 %v946
      %v948 = vpop.xlane.xlu0 %947
      %949 = vst.msk [vmem:[%s353] sm:$0xff] %vm603, %v948
      %v950 = vmul.f32 %v940, %v833
      %v951 = vmul.f32 %v941, %v835
      %v952 = vmul.f32 %v942, %v874
      %v953 = vadd.f32 %v950, %v951
      %v954 = vsel %vm944, %v952, 0.0
      %v955 = vadd.f32 %v953, %v954
      %956 = vadd.xlane.f32.xlu0 %v955
      %v957 = vpop.xlane.xlu0 %956
      %958 = vst.msk [vmem:[%s361] sm:$0xff] %vm603, %v957
      %p959 = scmp.lt.s32.totalorder %s21, 1
      %s960 = scalar_select %p959, %s21, 1
      %p961 = scmp.lt.s32.totalorder %s22, 7
      %s962 = scalar_select %p961, %s22, 7
      %s963 = smul.addr %s960, 8
      %s964 = sadd.s32 %s962, %s963
      %s965 = smul.addr %s964, 8
      %s966 = scalar_lea.vmem %s4, %s965
      %p967 = scmp.lt.s32.totalorder %s21, 1
      %s968 = scalar_select %p967, %s21, 1
      %p969 = scmp.lt.s32.totalorder %s22, 7
      %s970 = scalar_select %p969, %s22, 7
      %s971 = smul.addr %s968, 8
      %s972 = sadd.s32 %s970, %s971
      %s973 = smul.addr %s972, 8
      %s974 = scalar_lea.vmem %s5, %s973
      // Predicated region
      $region37: #{basic_conv3d.2} parent=35 // pred_check
        %p975 = pneg %p158
      $region38: #{basic_conv3d.2} parent=35 // pred_check_branch
        %977 = sbr.rel (%p975) target = $region40
      $region39: #{basic_conv3d.2} parent=35 // pred_region
        _
      $region40: #{basic_conv3d.2} parent=35 // pred_fallthru
        _
      // Predicated region
      $region41: #{basic_conv3d.2} parent=35 // pred_check
        %p978 = pneg %p186
      $region42: #{basic_conv3d.2} parent=35 // pred_check_branch
        %980 = sbr.rel (%p978) target = $region44
      $region43: #{basic_conv3d.2} parent=35 // pred_region
        _
      $region44: #{basic_conv3d.2} parent=35 // pred_fallthru
        _
    $region36: #{basic_conv3d.2} parent=5 // pred_fallthru
      _
    %p981 = scmp.le.s32.totalorder 2, %s12
    // Predicated region
    $region45: #{basic_conv3d.2} parent=5 // pred_check
      %p982 = pneg %p981
    $region46: #{basic_conv3d.2} parent=5 // pred_check_branch
      %984 = sbr.rel (%p982) target = $region48
    $region47: #{basic_conv3d.2} parent=5 // pred_region
      %s985 = ssub.s32 %s12, 2
      // Predicated region
      $region49: #{basic_conv3d.2} parent=47 // pred_check
        %p986 = pneg %p164
      $region50: #{basic_conv3d.2} parent=47 // pred_check_branch
        %988 = sbr.rel (%p986) target = $region52
      $region51: #{basic_conv3d.2} parent=47 // pred_region
        %p989 = scmp.lt.s32.totalorder %s23, 1
        %s990 = scalar_select %p989, %s23, 1
        %p991 = scmp.lt.s32.totalorder %s24, 7
        %s992 = scalar_select %p991, %s24, 7
        %s993 = smul.addr %s990, 8
        %s994 = sadd.s32 %s992, %s993
        %s995 = smul.addr %s994, 8
        %s996 = scalar_lea.vmem %s4, %s995
      $region52: #{basic_conv3d.2} parent=47 // pred_fallthru
        _
      // Predicated region
      $region53: #{basic_conv3d.2} parent=47 // pred_check
        %p997 = pneg %p192
      $region54: #{basic_conv3d.2} parent=47 // pred_check_branch
        %999 = sbr.rel (%p997) target = $region56
      $region55: #{basic_conv3d.2} parent=47 // pred_region
        %p1000 = scmp.lt.s32.totalorder %s23, 1
        %s1001 = scalar_select %p1000, %s23, 1
        %p1002 = scmp.lt.s32.totalorder %s24, 7
        %s1003 = scalar_select %p1002, %s24, 7
        %s1004 = smul.addr %s1001, 8
        %s1005 = sadd.s32 %s1003, %s1004
        %s1006 = smul.addr %s1005, 8
        %s1007 = scalar_lea.vmem %s5, %s1006
      $region56: #{basic_conv3d.2} parent=47 // pred_fallthru
        _
    $region48: #{basic_conv3d.2} parent=5 // pred_fallthru
      _
  $region6: #{basic_conv3d.2} parent=0 // loop_footer
    %s16 = sadd.s32 1, %s12
  $region7: #{basic_conv3d.2} parent=0 // loop_footer_branch
    %11 = sbr.rel target = $region3
  $region8: #{basic_conv3d.2} parent=0 // loop_exit
    _

</llo_original>
